<compile_context>
chip_gen: v7x
topology: tpu7x:2x2x1
jax: 0.10.0
libtpu: 0.0.40
codegen_flags: <defaults>
</compile_context>

<pallas_src>
import functools

import jax
import jax.numpy as jnp
from jax.experimental import pallas as pl
from jax.experimental.pallas import tpu as pltpu


def _vae_encoder_kernel(x_ref, w1_ref, b1_ref, w2_ref, b2_ref, h2_ref, *, eps):
    # ---- row-wise L2 normalize (F.normalize, p=2, dim=1), all f32 ----
    x = x_ref[...].astype(jnp.float32)
    sq = jnp.sum(x * x, axis=1, keepdims=True)
    # x / max(||x||, eps) == x * rsqrt(max(||x||^2, eps^2))
    inv_norm = jax.lax.rsqrt(jnp.maximum(sq, eps * eps))
    h = (x * inv_norm).astype(jnp.bfloat16)

    # ---- layer 0: Linear + tanh (Dropout == identity in eval mode) ----
    h1 = jnp.dot(h, w1_ref[...], preferred_element_type=jnp.float32) + b1_ref[...]
    h1 = jnp.tanh(h1).astype(jnp.bfloat16)

    # ---- layer 1 (last): Linear; lane-dense h2, mu/logvar split in wrapper ----
    h2 = jnp.dot(h1, w2_ref[...], preferred_element_type=jnp.float32) + b2_ref[...]
    h2_ref[...] = h2.astype(h2_ref.dtype)


def _build_encoder_call(B, D0, D1, D2, batch_tile, single_buffer_weights):
    kernel = functools.partial(_vae_encoder_kernel, eps=1e-12)

    if single_buffer_weights:
        const_kwargs = dict(pipeline_mode=pl.Buffered(1))
    else:
        const_kwargs = {}

    # VMEM budget: double-buffered x & h2 tiles + single-copy bf16 weights + biases.
    est = (2 * batch_tile * D0 * 4 + 2 * batch_tile * D2 * 4
           + (D0 * D1 + D1 * D2) * 2 + (D1 + D2) * 4)
    vmem_limit = int(min(max(2 * est, 32 * 1024 * 1024), 64 * 1024 * 1024))

    return pl.pallas_call(
        kernel,
        out_shape=jax.ShapeDtypeStruct((B, D2), jnp.float32),
        grid_spec=pltpu.PrefetchScalarGridSpec(
            num_scalar_prefetch=0,
            grid=(B // batch_tile,),
            in_specs=[
                # X: tiled over the batch
                pl.BlockSpec((batch_tile, D0), lambda i: (i, 0)),
                # Weights / biases: constant block for every grid step
                pl.BlockSpec((D0, D1), lambda i: (0, 0), **const_kwargs),
                pl.BlockSpec((1, D1), lambda i: (0, 0), **const_kwargs),
                pl.BlockSpec((D1, D2), lambda i: (0, 0), **const_kwargs),
                pl.BlockSpec((1, D2), lambda i: (0, 0), **const_kwargs),
            ],
            out_specs=pl.BlockSpec((batch_tile, D2), lambda i: (i, 0)),
        ),
        compiler_params=pltpu.CompilerParams(
            dimension_semantics=("parallel",),
            vmem_limit_bytes=vmem_limit,
        ),
    )


def vae_encoder_forward(x, w1, b1, w2, b2, latent_dim, *, batch_tile=128):
    """2-layer VAEEncoder forward pass in one Pallas kernel.

    x : (B, D0) f32        w1 : (D0, D1)   b1 : (1, D1)
    w2 : (D1, 2*latent)    b2 : (1, 2*latent)
    Weights are stored transposed vs. PyTorch so the kernel computes h @ W + b.
    Returns (mu, logvar), each (B, latent_dim), f32.
    """
    B, D0 = x.shape
    D1 = w1.shape[1]
    D2 = w2.shape[1]
    assert D2 == 2 * latent_dim
    batch_tile = min(batch_tile, B)
    assert B % batch_tile == 0, "pad the batch to a multiple of batch_tile"

    # bf16 weights for the MXU (halves weight HBM traffic); activations/biases f32.
    x = x.astype(jnp.float32)
    w1b = w1.astype(jnp.bfloat16)
    w2b = w2.astype(jnp.bfloat16)
    b1 = b1.astype(jnp.float32)
    b2 = b2.astype(jnp.float32)

    try:
        call = _build_encoder_call(B, D0, D1, D2, batch_tile, True)
        h2 = jax.block_until_ready(call(x, w1b, b1, w2b, b2))
    except Exception:
        # Fallback: this JAX version does not accept pipeline_mode on
        # pallas_call BlockSpecs -> use default double-buffering.
        call = _build_encoder_call(B, D0, D1, D2, batch_tile, False)
        h2 = jax.block_until_ready(call(x, w1b, b1, w2b, b2))

    # Lane-dense kernel output; mu/logvar split is free wrapper-side slicing.
    return h2[:, :latent_dim], h2[:, latent_dim:]


# ---------------------------------------------------------------------------
# Deterministic parameter init matching the PyTorch module's init_weights:
#   Linear.weight  -> xavier_uniform_
#   Linear.bias    -> normal(std=0.001)
# ---------------------------------------------------------------------------
def xavier_uniform(key, fan_in, fan_out):
    bound = jnp.sqrt(6.0 / (fan_in + fan_out))
    # stored as (in_features, out_features), i.e. transpose of the torch layout
    return jax.random.uniform(key, (fan_in, fan_out),
                              minval=-bound, maxval=bound, dtype=jnp.float32)


def make_params(key, q_dims):
    # q_dims_ = q_dims[:-1] + [q_dims[-1] * 2]  (canonical 2-layer encoder)
    assert len(q_dims) == 3, "this kernel implements the canonical 2-layer encoder"
    d0, d1, latent = q_dims
    k1, k2, k3, k4 = jax.random.split(key, 4)
    w1 = xavier_uniform(k1, d0, d1)
    b1 = (0.001 * jax.random.normal(k2, (1, d1))).astype(jnp.float32)
    w2 = xavier_uniform(k3, d1, 2 * latent)
    b2 = (0.001 * jax.random.normal(k4, (1, 2 * latent))).astype(jnp.float32)
    return w1, b1, w2, b2


def reference_forward(x, w1, b1, w2, b2, latent_dim, matmul_dtype=jnp.bfloat16):
    """Pure-JAX reference of the PyTorch forward (eval mode), with the same
    mixed-precision matmul policy as the kernel (bf16 MXU, f32 accumulation)."""
    norm = jnp.sqrt(jnp.sum(x * x, axis=1, keepdims=True))
    h = x / jnp.maximum(norm, 1e-12)
    h = jnp.tanh(jnp.dot(h.astype(matmul_dtype), w1.astype(matmul_dtype),
                         preferred_element_type=jnp.float32) + b1)
    h2 = jnp.dot(h.astype(matmul_dtype), w2.astype(matmul_dtype),
                 preferred_element_type=jnp.float32) + b2
    return h2[:, :latent_dim], h2[:, latent_dim:]


if __name__ == "__main__":
    # q_dims = [input=256, hidden=128, latent=64]; batch 256 -> 2 grid steps of 128
    q_dims = [256, 128, 64]
    latent_dim = q_dims[-1]
    B = 256

    key = jax.random.PRNGKey(0)
    kx, kp = jax.random.split(key)

    # non-negative "bag-of-items" style input, like mult-vae click counts
    x = jax.random.uniform(kx, (B, q_dims[0]), dtype=jnp.float32)
    w1, b1, w2, b2 = make_params(kp, q_dims)

    mu, logvar = vae_encoder_forward(x, w1, b1, w2, b2, latent_dim, batch_tile=128)
    mu, logvar = jax.block_until_ready((mu, logvar))

    # correctness check vs pure-JAX reference (same bf16-matmul policy)
    mu_ref, logvar_ref = reference_forward(x, w1, b1, w2, b2, latent_dim)
    assert mu.shape == (B, latent_dim) and logvar.shape == (B, latent_dim)
    assert jnp.allclose(mu, mu_ref, atol=5e-3, rtol=2e-2)
    assert jnp.allclose(logvar, logvar_ref, atol=5e-3, rtol=2e-2)

    print("KERNEL_OK")
</pallas_src>

<mosaic_0001>
module attributes {stable_mosaic.version = 11 : i64} {
  func.func @_vae_encoder_kernel(%arg0: i32, %arg1: memref<128x256xf32, #tpu.memory_space<vmem>>, %arg2: memref<256x128xbf16, #tpu.memory_space<vmem>>, %arg3: memref<1x128xf32, #tpu.memory_space<vmem>>, %arg4: memref<128x128xbf16, #tpu.memory_space<vmem>>, %arg5: memref<1x128xf32, #tpu.memory_space<vmem>>, %arg6: memref<128x128xf32, #tpu.memory_space<vmem>>) attributes {dimension_semantics = [#tpu.dimension_semantics<parallel>], iteration_bounds = array<i64: 2>, scalar_prefetch = 0 : i64, scratch_operands = 0 : i64, tpu.core_type = #tpu.core_type<tc>, window_params = [{transform_indices = @transform_0, window_bounds = array<i64: 128, 256>}, {pipeline_mode = #tpu.pipeline_mode<synchronous>, transform_indices = @transform_1, window_bounds = array<i64: 256, 128>}, {pipeline_mode = #tpu.pipeline_mode<synchronous>, transform_indices = @transform_2, window_bounds = array<i64: 1, 128>}, {pipeline_mode = #tpu.pipeline_mode<synchronous>, transform_indices = @transform_3, window_bounds = array<i64: 128, 128>}, {pipeline_mode = #tpu.pipeline_mode<synchronous>, transform_indices = @transform_4, window_bounds = array<i64: 1, 128>}, {transform_indices = @transform_5, window_bounds = array<i64: 128, 128>}]} {
    %c0 = arith.constant 0 : index
    %c0_0 = arith.constant 0 : index
    %0 = vector.load %arg1[%c0, %c0_0] : memref<128x256xf32, #tpu.memory_space<vmem>>, vector<128x256xf32>
    %1 = arith.mulf %0, %0 : vector<128x256xf32>
    %cst = arith.constant dense<0.000000e+00> : vector<128xf32>
    %2 = vector.multi_reduction <add>, %1, %cst [1] : vector<128x256xf32> to vector<128xf32>
    %3 = vector.shape_cast %2 : vector<128xf32> to vector<128x1xf32>
    %cst_1 = arith.constant 1.000000e-24 : f32
    %4 = vector.broadcast %cst_1 : f32 to vector<128x1xf32>
    %5 = arith.maximumf %3, %4 : vector<128x1xf32>
    %6 = math.rsqrt %5 : vector<128x1xf32>
    %7 = vector.broadcast %6 : vector<128x1xf32> to vector<128x256xf32>
    %8 = arith.mulf %0, %7 : vector<128x256xf32>
    %9 = arith.truncf %8 : vector<128x256xf32> to vector<128x256xbf16>
    %c0_2 = arith.constant 0 : index
    %c0_3 = arith.constant 0 : index
    %10 = vector.load %arg2[%c0_2, %c0_3] : memref<256x128xbf16, #tpu.memory_space<vmem>>, vector<256x128xbf16>
    %cst_4 = arith.constant dense<0.000000e+00> : vector<128x128xf32>
    %11 = tpu.matmul %9, %10, %cst_4 {dimension_numbers = #tpu.dot_dimension_numbers<[1], [0], [0], [1], [0, 0, 1, 1], [], []>} : vector<128x256xbf16>, vector<256x128xbf16>, vector<128x128xf32> -> vector<128x128xf32>
    %c0_5 = arith.constant 0 : index
    %c0_6 = arith.constant 0 : index
    %12 = vector.load %arg3[%c0_5, %c0_6] : memref<1x128xf32, #tpu.memory_space<vmem>>, vector<1x128xf32>
    %13 = vector.broadcast %12 : vector<1x128xf32> to vector<128x128xf32>
    %14 = arith.addf %11, %13 : vector<128x128xf32>
    %15 = math.tanh %14 : vector<128x128xf32>
    %16 = arith.truncf %15 : vector<128x128xf32> to vector<128x128xbf16>
    %c0_7 = arith.constant 0 : index
    %c0_8 = arith.constant 0 : index
    %17 = vector.load %arg4[%c0_7, %c0_8] : memref<128x128xbf16, #tpu.memory_space<vmem>>, vector<128x128xbf16>
    %cst_9 = arith.constant dense<0.000000e+00> : vector<128x128xf32>
    %18 = tpu.matmul %16, %17, %cst_9 {dimension_numbers = #tpu.dot_dimension_numbers<[1], [0], [0], [1], [0, 0, 1, 1], [], []>} : vector<128x128xbf16>, vector<128x128xbf16>, vector<128x128xf32> -> vector<128x128xf32>
    %c0_10 = arith.constant 0 : index
    %c0_11 = arith.constant 0 : index
    %19 = vector.load %arg5[%c0_10, %c0_11] : memref<1x128xf32, #tpu.memory_space<vmem>>, vector<1x128xf32>
    %20 = vector.broadcast %19 : vector<1x128xf32> to vector<128x128xf32>
    %21 = arith.addf %18, %20 : vector<128x128xf32>
    %c0_12 = arith.constant 0 : index
    %c0_13 = arith.constant 0 : index
    %22 = vector.load %arg6[%c0_12, %c0_13] : memref<128x128xf32, #tpu.memory_space<vmem>>, vector<128x128xf32>
    tpu.vector_store %arg6[%c0_12, %c0_13], %21 {strides = array<i32>} : memref<128x128xf32, #tpu.memory_space<vmem>>, vector<128x128xf32>,
    return
  }
  func.func @transform_0(%arg0: i32) -> (i32, i32) {
    %c0_i32 = arith.constant 0 : i32
    %c0_i32_0 = arith.constant 0 : i32
    return %arg0, %c0_i32 : i32, i32
  }
  func.func @transform_1(%arg0: i32) -> (i32, i32) {
    %c0_i32 = arith.constant 0 : i32
    %c0_i32_0 = arith.constant 0 : i32
    %c0_i32_1 = arith.constant 0 : i32
    return %c0_i32, %c0_i32_0 : i32, i32
  }
  func.func @transform_2(%arg0: i32) -> (i32, i32) {
    %c0_i32 = arith.constant 0 : i32
    %c0_i32_0 = arith.constant 0 : i32
    %c0_i32_1 = arith.constant 0 : i32
    return %c0_i32, %c0_i32_0 : i32, i32
  }
  func.func @transform_3(%arg0: i32) -> (i32, i32) {
    %c0_i32 = arith.constant 0 : i32
    %c0_i32_0 = arith.constant 0 : i32
    %c0_i32_1 = arith.constant 0 : i32
    return %c0_i32, %c0_i32_0 : i32, i32
  }
  func.func @transform_4(%arg0: i32) -> (i32, i32) {
    %c0_i32 = arith.constant 0 : i32
    %c0_i32_0 = arith.constant 0 : i32
    %c0_i32_1 = arith.constant 0 : i32
    return %c0_i32, %c0_i32_0 : i32, i32
  }
  func.func @transform_5(%arg0: i32) -> (i32, i32) {
    %c0_i32 = arith.constant 0 : i32
    %c0_i32_0 = arith.constant 0 : i32
    return %arg0, %c0_i32 : i32, i32
  }
}

module attributes {stable_mosaic.version = 11 : i64} {
  func.func @_vae_encoder_kernel(%arg0: i32, %arg1: memref<128x256xf32, #tpu.memory_space<vmem>>, %arg2: memref<256x128xbf16, #tpu.memory_space<vmem>>, %arg3: memref<1x128xf32, #tpu.memory_space<vmem>>, %arg4: memref<128x128xbf16, #tpu.memory_space<vmem>>, %arg5: memref<1x128xf32, #tpu.memory_space<vmem>>, %arg6: memref<128x128xf32, #tpu.memory_space<vmem>>) attributes {dimension_semantics = [#tpu.dimension_semantics<parallel>], iteration_bounds = array<i64: 2>, scalar_prefetch = 0 : i64, scratch_operands = 0 : i64, tpu.core_type = #tpu.core_type<tc>, window_params = [{transform_indices = @transform_0, window_bounds = array<i64: 128, 256>}, {pipeline_mode = #tpu.pipeline_mode<synchronous>, transform_indices = @transform_1, window_bounds = array<i64: 256, 128>}, {pipeline_mode = #tpu.pipeline_mode<synchronous>, transform_indices = @transform_2, window_bounds = array<i64: 1, 128>}, {pipeline_mode = #tpu.pipeline_mode<synchronous>, transform_indices = @transform_3, window_bounds = array<i64: 128, 128>}, {pipeline_mode = #tpu.pipeline_mode<synchronous>, transform_indices = @transform_4, window_bounds = array<i64: 1, 128>}, {transform_indices = @transform_5, window_bounds = array<i64: 128, 128>}]} {
    %c0 = arith.constant 0 : index
    %c0_0 = arith.constant 0 : index
    %0 = vector.load %arg1[%c0, %c0_0] : memref<128x256xf32, #tpu.memory_space<vmem>>, vector<128x256xf32>
    %1 = arith.mulf %0, %0 : vector<128x256xf32>
    %cst = arith.constant dense<0.000000e+00> : vector<128xf32>
    %2 = vector.multi_reduction <add>, %1, %cst [1] : vector<128x256xf32> to vector<128xf32>
    %3 = vector.shape_cast %2 : vector<128xf32> to vector<128x1xf32>
    %cst_1 = arith.constant 1.000000e-24 : f32
    %4 = vector.broadcast %cst_1 : f32 to vector<128x1xf32>
    %5 = arith.maximumf %3, %4 : vector<128x1xf32>
    %6 = math.rsqrt %5 : vector<128x1xf32>
    %7 = vector.broadcast %6 : vector<128x1xf32> to vector<128x256xf32>
    %8 = arith.mulf %0, %7 : vector<128x256xf32>
    %9 = arith.truncf %8 : vector<128x256xf32> to vector<128x256xbf16>
    %c0_2 = arith.constant 0 : index
    %c0_3 = arith.constant 0 : index
    %10 = vector.load %arg2[%c0_2, %c0_3] : memref<256x128xbf16, #tpu.memory_space<vmem>>, vector<256x128xbf16>
    %cst_4 = arith.constant dense<0.000000e+00> : vector<128x128xf32>
    %11 = tpu.matmul %9, %10, %cst_4 {dimension_numbers = #tpu.dot_dimension_numbers<[1], [0], [0], [1], [0, 0, 1, 1], [], []>} : vector<128x256xbf16>, vector<256x128xbf16>, vector<128x128xf32> -> vector<128x128xf32>
    %c0_5 = arith.constant 0 : index
    %c0_6 = arith.constant 0 : index
    %12 = vector.load %arg3[%c0_5, %c0_6] : memref<1x128xf32, #tpu.memory_space<vmem>>, vector<1x128xf32>
    %13 = vector.broadcast %12 : vector<1x128xf32> to vector<128x128xf32>
    %14 = arith.addf %11, %13 : vector<128x128xf32>
    %15 = math.tanh %14 : vector<128x128xf32>
    %16 = arith.truncf %15 : vector<128x128xf32> to vector<128x128xbf16>
    %c0_7 = arith.constant 0 : index
    %c0_8 = arith.constant 0 : index
    %17 = vector.load %arg4[%c0_7, %c0_8] : memref<128x128xbf16, #tpu.memory_space<vmem>>, vector<128x128xbf16>
    %cst_9 = arith.constant dense<0.000000e+00> : vector<128x128xf32>
    %18 = tpu.matmul %16, %17, %cst_9 {dimension_numbers = #tpu.dot_dimension_numbers<[1], [0], [0], [1], [0, 0, 1, 1], [], []>} : vector<128x128xbf16>, vector<128x128xbf16>, vector<128x128xf32> -> vector<128x128xf32>
    %c0_10 = arith.constant 0 : index
    %c0_11 = arith.constant 0 : index
    %19 = vector.load %arg5[%c0_10, %c0_11] : memref<1x128xf32, #tpu.memory_space<vmem>>, vector<1x128xf32>
    %20 = vector.broadcast %19 : vector<1x128xf32> to vector<128x128xf32>
    %21 = arith.addf %18, %20 : vector<128x128xf32>
    %c0_12 = arith.constant 0 : index
    %c0_13 = arith.constant 0 : index
    %22 = vector.load %arg6[%c0_12, %c0_13] : memref<128x128xf32, #tpu.memory_space<vmem>>, vector<128x128xf32>
    tpu.vector_store %arg6[%c0_12, %c0_13], %21 {strides = array<i32>} : memref<128x128xf32, #tpu.memory_space<vmem>>, vector<128x128xf32>,
    return
  }
  func.func @transform_0(%arg0: i32) -> (i32, i32) {
    %c0_i32 = arith.constant 0 : i32
    %c0_i32_0 = arith.constant 0 : i32
    return %arg0, %c0_i32 : i32, i32
  }
  func.func @transform_1(%arg0: i32) -> (i32, i32) {
    %c0_i32 = arith.constant 0 : i32
    %c0_i32_0 = arith.constant 0 : i32
    %c0_i32_1 = arith.constant 0 : i32
    return %c0_i32, %c0_i32_0 : i32, i32
  }
  func.func @transform_2(%arg0: i32) -> (i32, i32) {
    %c0_i32 = arith.constant 0 : i32
    %c0_i32_0 = arith.constant 0 : i32
    %c0_i32_1 = arith.constant 0 : i32
    return %c0_i32, %c0_i32_0 : i32, i32
  }
  func.func @transform_3(%arg0: i32) -> (i32, i32) {
    %c0_i32 = arith.constant 0 : i32
    %c0_i32_0 = arith.constant 0 : i32
    %c0_i32_1 = arith.constant 0 : i32
    return %c0_i32, %c0_i32_0 : i32, i32
  }
  func.func @transform_4(%arg0: i32) -> (i32, i32) {
    %c0_i32 = arith.constant 0 : i32
    %c0_i32_0 = arith.constant 0 : i32
    %c0_i32_1 = arith.constant 0 : i32
    return %c0_i32, %c0_i32_0 : i32, i32
  }
  func.func @transform_5(%arg0: i32) -> (i32, i32) {
    %c0_i32 = arith.constant 0 : i32
    %c0_i32_0 = arith.constant 0 : i32
    return %arg0, %c0_i32 : i32, i32
  }
}

</mosaic_0001>

<llo_original>
// kernel: tpu_custom_call.1
$region0: #{tpu_custom_call.1}
  #allocation0 [shape = 'u32[]', space=smem, size = 0x4, offset = 0x4, fixed_abs, tag = 'smem constant byte address 0x4 - core index']
  #allocation1 [shape = 'u32[144,128]{1,0:T(1,128)}', space=vmem, size = 0x12000, scoped, tag = 'internal scratch']
  %s0 = inlined_call_operand.hbm [shape: f32[256,256], index: 0, kind: input, shape index: {}]
  %s1 = inlined_call_operand.hbm [shape: bf16[256,128], index: 1, kind: input, shape index: {}]
  %s2 = inlined_call_operand.vmem [shape: f32[1,128], index: 2, kind: input, shape index: {}]
  %s3 = inlined_call_operand.hbm [shape: bf16[128,128], index: 3, kind: input, shape index: {}]
  %s4 = inlined_call_operand.vmem [shape: f32[1,128], index: 4, kind: input, shape index: {}]
  %s5 = inlined_call_operand.hbm [shape: f32[256,128], index: 5, kind: output, shape index: {}]
  %s6 = sld [smem:[#allocation0]]
  $region65: #{tpu_custom_call.1} parent=0
    _
  %s8 = ssub.s32 1, %s6
  %s9 = scalar_select 0, %s8, %s6
  $region1: #{tpu_custom_call.1} parent=0
    #allocation2 [shape = 'u8[262144]{0}', space=vmem, size = 0x40000, scoped, tag = 'input window, operand 0']
    #allocation3 [shape = 's32[2]{0}', space=sflag, size = 0x8, scoped, tag = 'scoped memory for tpu_custom_call.1']
    #allocation4 [shape = 's32[2]{0}', space=sflag, size = 0x8, scoped, tag = 'scoped memory for tpu_custom_call.1']
    #allocation5 [shape = 'u8[65536]{0}', space=vmem, size = 0x10000, scoped, tag = 'input window, operand 1, single buffered']
    #allocation6 [shape = 's32[1]{0}', space=sflag, size = 0x4, scoped, tag = 'scoped memory for tpu_custom_call.1']
    #allocation7 [shape = 'u8[32768]{0}', space=vmem, size = 0x8000, scoped, tag = 'input window, operand 3, single buffered']
    #allocation8 [shape = 'u8[131072]{0}', space=vmem, size = 0x20000, scoped, tag = 'output window, operand 0']
    %10 = vsyncpa [#allocation3], 0
    %s11 = scalar_lea.sflag [#allocation3], 1
    %12 = vsyncpa %s11, 0
    %13 = vsyncpa [#allocation6], 0
    %14 = vsyncpa [#allocation4], 0
    %s15 = scalar_lea.sflag [#allocation4], 1
    %16 = vsyncpa %s15, 0
    loop: start=0, step=1, limit=4
    $region2: #{tpu_custom_call.1} parent=1 // loop_pre_header
      _
    $region3: #{tpu_custom_call.1} parent=1 // loop_header
      %s18 = sphi 0, %s22
      %p19 = scmp.ge.s32.totalorder %s18, 4
      %s28 = sphi 0, %s30
      %s31 = sphi 0, %s28
      %s32 = sphi 0, %s31
      %s48 = sphi 0, %s32
      %s52 = sphi 0, %s52
      %s54 = sphi 0, %s52
      %s55 = sphi 0, %s54
      %s69 = sphi 0, %s55
      %s73 = sphi 0, %s73
      %s75 = sphi 0, %s73
      %s76 = sphi 0, %s75
      %s90 = sphi 0, %s76
      %s94 = sphi 0, %s94
      %s96 = sphi 0, %s94
      %s97 = sphi 0, %s96
      %s111 = sphi 0, %s97
      %s115 = sphi 0, %s115
      %s117 = sphi 0, %s115
      %s118 = sphi 0, %s117
      %s132 = sphi 0, %s118
      %s138 = sphi 0, %s140
      %s141 = sphi 0, %s138
      %s142 = sphi 0, %s141
      %s158 = sphi 0, %s142
    $region4: #{tpu_custom_call.1} parent=1 // loop_header_branch
      %21 = sbr.rel (%p19) target = $region8
    $region5: #{tpu_custom_call.1} parent=1 // loop_body
      %s23 = ssub.s32 %s18, 1
      %s24 = ssub.s32 %s18, 2
      %s25 = sadd.s32 %s18, 1
      %s26 = ssub.s32 %s18, %s25
      %p27 = scmp.eq.s32.totalorder %s26, 0
      %s29 = sadd.s32 %s28, 1
      %s30 = scalar_select %p27, %s28, %s29
      %p33 = pneg %p27
      %p34 = scmp.eq.s32.totalorder %s18, 1
      %p35 = por %p33, %p34
      %p36 = scmp.ne.s32.totalorder %s28, %s31
      %p37 = scmp.eq.s32.totalorder %s18, 0
      %p38 = por %p36, %p37
      %p39 = scmp.ne.s32.totalorder %s28, %s31
      %p40 = scmp.eq.s32.totalorder %s23, 1
      %p41 = por %p39, %p40
      %p42 = scmp.ne.s32.totalorder %s31, %s32
      %p43 = scmp.eq.s32.totalorder %s23, 0
      %p44 = por %p42, %p43
      %p45 = scmp.ne.s32.totalorder %s31, %s32
      %p46 = scmp.eq.s32.totalorder %s24, 1
      %p47 = por %p45, %p46
      %p49 = scmp.ne.s32.totalorder %s32, %s48
      %p50 = scmp.eq.s32.totalorder %s24, 0
      %p51 = por %p49, %p50
      %s53 = sadd.s32 %s52, 1
      %p56 = scmp.eq.s32.totalorder %s18, 1
      %p57 = scmp.ne.s32.totalorder %s52, %s54
      %p58 = scmp.eq.s32.totalorder %s18, 0
      %p59 = por %p57, %p58
      %p60 = scmp.ne.s32.totalorder %s52, %s54
      %p61 = scmp.eq.s32.totalorder %s23, 1
      %p62 = por %p60, %p61
      %p63 = scmp.ne.s32.totalorder %s54, %s55
      %p64 = scmp.eq.s32.totalorder %s23, 0
      %p65 = por %p63, %p64
      %p66 = scmp.ne.s32.totalorder %s54, %s55
      %p67 = scmp.eq.s32.totalorder %s24, 1
      %p68 = por %p66, %p67
      %p70 = scmp.ne.s32.totalorder %s55, %s69
      %p71 = scmp.eq.s32.totalorder %s24, 0
      %p72 = por %p70, %p71
      %s74 = sadd.s32 %s73, 1
      %p77 = scmp.eq.s32.totalorder %s18, 1
      %p78 = scmp.ne.s32.totalorder %s73, %s75
      %p79 = scmp.eq.s32.totalorder %s18, 0
      %p80 = por %p78, %p79
      %p81 = scmp.ne.s32.totalorder %s73, %s75
      %p82 = scmp.eq.s32.totalorder %s23, 1
      %p83 = por %p81, %p82
      %p84 = scmp.ne.s32.totalorder %s75, %s76
      %p85 = scmp.eq.s32.totalorder %s23, 0
      %p86 = por %p84, %p85
      %p87 = scmp.ne.s32.totalorder %s75, %s76
      %p88 = scmp.eq.s32.totalorder %s24, 1
      %p89 = por %p87, %p88
      %p91 = scmp.ne.s32.totalorder %s76, %s90
      %p92 = scmp.eq.s32.totalorder %s24, 0
      %p93 = por %p91, %p92
      %s95 = sadd.s32 %s94, 1
      %p98 = scmp.eq.s32.totalorder %s18, 1
      %p99 = scmp.ne.s32.totalorder %s94, %s96
      %p100 = scmp.eq.s32.totalorder %s18, 0
      %p101 = por %p99, %p100
      %p102 = scmp.ne.s32.totalorder %s94, %s96
      %p103 = scmp.eq.s32.totalorder %s23, 1
      %p104 = por %p102, %p103
      %p105 = scmp.ne.s32.totalorder %s96, %s97
      %p106 = scmp.eq.s32.totalorder %s23, 0
      %p107 = por %p105, %p106
      %p108 = scmp.ne.s32.totalorder %s96, %s97
      %p109 = scmp.eq.s32.totalorder %s24, 1
      %p110 = por %p108, %p109
      %p112 = scmp.ne.s32.totalorder %s97, %s111
      %p113 = scmp.eq.s32.totalorder %s24, 0
      %p114 = por %p112, %p113
      %s116 = sadd.s32 %s115, 1
      %p119 = scmp.eq.s32.totalorder %s18, 1
      %p120 = scmp.ne.s32.totalorder %s115, %s117
      %p121 = scmp.eq.s32.totalorder %s18, 0
      %p122 = por %p120, %p121
      %p123 = scmp.ne.s32.totalorder %s115, %s117
      %p124 = scmp.eq.s32.totalorder %s23, 1
      %p125 = por %p123, %p124
      %p126 = scmp.ne.s32.totalorder %s117, %s118
      %p127 = scmp.eq.s32.totalorder %s23, 0
      %p128 = por %p126, %p127
      %p129 = scmp.ne.s32.totalorder %s117, %s118
      %p130 = scmp.eq.s32.totalorder %s24, 1
      %p131 = por %p129, %p130
      %p133 = scmp.ne.s32.totalorder %s118, %s132
      %p134 = scmp.eq.s32.totalorder %s24, 0
      %p135 = por %p133, %p134
      %s136 = ssub.s32 %s18, %s25
      %p137 = scmp.eq.s32.totalorder %s136, 0
      %s139 = sadd.s32 %s138, 1
      %s140 = scalar_select %p137, %s138, %s139
      %p143 = pneg %p137
      %p144 = scmp.eq.s32.totalorder %s18, 1
      %p145 = por %p143, %p144
      %p146 = scmp.ne.s32.totalorder %s138, %s141
      %p147 = scmp.eq.s32.totalorder %s18, 0
      %p148 = por %p146, %p147
      %p149 = scmp.ne.s32.totalorder %s138, %s141
      %p150 = scmp.eq.s32.totalorder %s23, 1
      %p151 = por %p149, %p150
      %p152 = scmp.ne.s32.totalorder %s141, %s142
      %p153 = scmp.eq.s32.totalorder %s23, 0
      %p154 = por %p152, %p153
      %p155 = scmp.ne.s32.totalorder %s141, %s142
      %p156 = scmp.eq.s32.totalorder %s24, 1
      %p157 = por %p155, %p156
      %p159 = scmp.ne.s32.totalorder %s142, %s158
      %p160 = scmp.eq.s32.totalorder %s24, 0
      %p161 = por %p159, %p160
      %p162 = scmp.le.s32.totalorder 1, %s18
      %p163 = scmp.lt.s32.totalorder %s18, 3
      %p164 = pnand %p162, %p163
      %p165 = pneg %p164
      // Predicated region
      $region9: #{tpu_custom_call.1} parent=5 // pred_check
        _
      $region10: #{tpu_custom_call.1} parent=5 // pred_check_branch
        %167 = sbr.rel (%p164) target = $region12
      $region11: #{tpu_custom_call.1} parent=5 // pred_region
        %s168 = ssub.s32 %s18, 1
        // Predicated region
        $region13: #{tpu_custom_call.1} parent=11 // pred_check
          %p169 = pneg %p65
        $region14: #{tpu_custom_call.1} parent=11 // pred_check_branch
          %171 = sbr.rel (%p169) target = $region16
        $region15: #{tpu_custom_call.1} parent=11 // pred_region
          %s173 = ssub.s32 2048, 2048
          %174 = vsyncadd [#allocation6], %s173
          %s175 = sshll.u32 [#allocation5], 4
          %s176 = int_to_ptr.vmem [resolvable:$true] %s175
          %181 = dma.hbm_to_vmem [thread:$0]  %s1, 2048, %s176, [#allocation6], 64, 64, 4
        $region16: #{tpu_custom_call.1} parent=11 // pred_fallthru
          _
        // Predicated region
        $region17: #{tpu_custom_call.1} parent=11 // pred_check
          %p182 = pneg %p86
        $region18: #{tpu_custom_call.1} parent=11 // pred_check_branch
          %184 = sbr.rel (%p182) target = $region20
        $region19: #{tpu_custom_call.1} parent=11 // pred_region
          _
        $region20: #{tpu_custom_call.1} parent=11 // pred_fallthru
          _
        // Predicated region
        $region21: #{tpu_custom_call.1} parent=11 // pred_check
          %p185 = pneg %p107
        $region22: #{tpu_custom_call.1} parent=11 // pred_check_branch
          %187 = sbr.rel (%p185) target = $region24
        $region23: #{tpu_custom_call.1} parent=11 // pred_region
          %s189 = ssub.s32 1024, 1024
          %190 = vsyncadd [#allocation6], %s189
          %s191 = sshll.u32 [#allocation7], 4
          %s192 = int_to_ptr.vmem [resolvable:$true] %s191
          %197 = dma.hbm_to_vmem [thread:$0]  %s3, 1024, %s192, [#allocation6], 64, 64, 4
        $region24: #{tpu_custom_call.1} parent=11 // pred_fallthru
          _
        // Predicated region
        $region25: #{tpu_custom_call.1} parent=11 // pred_check
          %p198 = pneg %p128
        $region26: #{tpu_custom_call.1} parent=11 // pred_check_branch
          %200 = sbr.rel (%p198) target = $region28
        $region27: #{tpu_custom_call.1} parent=11 // pred_region
          _
        $region28: #{tpu_custom_call.1} parent=11 // pred_fallthru
          _
      $region12: #{tpu_custom_call.1} parent=5 // pred_fallthru
        _
      %p201 = scmp.lt.s32.totalorder %s18, 2
      // Predicated region
      $region29: #{tpu_custom_call.1} parent=5 // pred_check
        %p202 = pneg %p201
      $region30: #{tpu_custom_call.1} parent=5 // pred_check_branch
        %204 = sbr.rel (%p202) target = $region32
      $region31: #{tpu_custom_call.1} parent=5 // pred_region
        // Predicated region
        $region33: #{tpu_custom_call.1} parent=31 // pred_check
          %p205 = pneg %p38
        $region34: #{tpu_custom_call.1} parent=31 // pred_check_branch
          %207 = sbr.rel (%p205) target = $region36
        $region35: #{tpu_custom_call.1} parent=31 // pred_region
          %s208 = sand.u32 %s28, 1
          %s209 = scalar_lea.sflag [#allocation3], %s208
          %s210 = sand.u32 %s28, 1
          %s211 = smul.addr %s210, 256
          %s212 = scalar_lea.vmem [#allocation2], %s211
          %s213 = smul.u32 16, %s18
          %s215 = ssub.s32 4096, 4096
          %216 = vsyncadd %s209, %s215
          %s217 = smul.addr %s213, 2
          %s218 = smul.addr %s217, 128
          %s219 = scalar_lea.hbm %s0, %s218
          %s220 = sshll.u32 %s212, 4
          %s221 = int_to_ptr.vmem [resolvable:$true] %s220
          %226 = dma.hbm_to_vmem [thread:$0]  %s219, 4096, %s221, %s209, 256, 256, 16
        $region36: #{tpu_custom_call.1} parent=31 // pred_fallthru
          _
      $region32: #{tpu_custom_call.1} parent=5 // pred_fallthru
        _
      %p227 = scmp.le.s32.totalorder 1, %s18
      %p228 = scmp.lt.s32.totalorder %s18, 3
      %p229 = pnand %p227, %p228
      %p230 = pneg %p229
      // Predicated region
      $region37: #{tpu_custom_call.1} parent=5 // pred_check
        _
      $region38: #{tpu_custom_call.1} parent=5 // pred_check_branch
        %232 = sbr.rel (%p229) target = $region40
      $region39: #{tpu_custom_call.1} parent=5 // pred_region
        %s233 = ssub.s32 %s18, 1
        %s234 = sand.u32 %s31, 1
        %s235 = scalar_lea.sflag [#allocation3], %s234
        %s236 = sand.u32 %s31, 1
        %s237 = smul.addr %s236, 256
        %s238 = scalar_lea.vmem [#allocation2], %s237
        // Predicated region
        $region41: #{tpu_custom_call.1} parent=39 // pred_check
          %p239 = pneg %p44
        $region42: #{tpu_custom_call.1} parent=39 // pred_check_branch
          %241 = sbr.rel (%p239) target = $region44
        $region43: #{tpu_custom_call.1} parent=39 // pred_region
          %242 = dma.done %s235, 4096
        $region44: #{tpu_custom_call.1} parent=39 // pred_fallthru
          _
        // Predicated region
        $region45: #{tpu_custom_call.1} parent=39 // pred_check
          %p243 = pneg %p65
        $region46: #{tpu_custom_call.1} parent=39 // pred_check_branch
          %245 = sbr.rel (%p243) target = $region48
        $region47: #{tpu_custom_call.1} parent=39 // pred_region
          %246 = dma.done [#allocation6], 2048
        $region48: #{tpu_custom_call.1} parent=39 // pred_fallthru
          _
        // Predicated region
        $region49: #{tpu_custom_call.1} parent=39 // pred_check
          %p247 = pneg %p107
        $region50: #{tpu_custom_call.1} parent=39 // pred_check_branch
          %249 = sbr.rel (%p247) target = $region52
        $region51: #{tpu_custom_call.1} parent=39 // pred_region
          %250 = dma.done [#allocation6], 1024
        $region52: #{tpu_custom_call.1} parent=39 // pred_fallthru
          _
        %s251 = sand.u32 %s31, 1
        %s252 = scalar_lea.sflag [#allocation3], %s251
        %s253 = sand.u32 %s31, 1
        %s254 = smul.addr %s253, 256
        %s255 = scalar_lea.vmem [#allocation2], %s254
        %p256 = pneg %p44
        %p257 = pneg %p41
        %p258 = pneg %p65
        %p259 = pneg %p62
        %p260 = pneg %p86
        %p261 = pneg %p83
        %p262 = pneg %p107
        %p263 = pneg %p104
        %p264 = pneg %p128
        %p265 = pneg %p125
        %p266 = pneg %p154
        %p267 = pneg %p151
        %s268 = sand.u32 %s141, 1
        %s269 = scalar_lea.sflag [#allocation4], %s268
        %s270 = sand.u32 %s141, 1
        %s271 = smul.addr %s270, 128
        %s272 = scalar_lea.vmem [#allocation8], %s271
        %s273 = smul.u32 16, %s23
        %s274 = smul.u32 16, %s23
        %v276 = vld [vmem:[%s238] sm:$0xff]
        %v277 = vld [vmem:[%s238 + $0x8] sm:$0xff]
        %v278 = vld [vmem:[%s238 + $0x10] sm:$0xff]
        %v279 = vld [vmem:[%s238 + $0x18] sm:$0xff]
        %v280 = vld [vmem:[%s238 + $0x20] sm:$0xff]
        %v281 = vld [vmem:[%s238 + $0x28] sm:$0xff]
        %v282 = vld [vmem:[%s238 + $0x30] sm:$0xff]
        %v283 = vld [vmem:[%s238 + $0x38] sm:$0xff]
        %v284 = vld [vmem:[%s238 + $0x40] sm:$0xff]
        %v285 = vld [vmem:[%s238 + $0x48] sm:$0xff]
        %v286 = vld [vmem:[%s238 + $0x50] sm:$0xff]
        %v287 = vld [vmem:[%s238 + $0x58] sm:$0xff]
        %v288 = vld [vmem:[%s238 + $0x60] sm:$0xff]
        %v289 = vld [vmem:[%s238 + $0x68] sm:$0xff]
        %v290 = vld [vmem:[%s238 + $0x70] sm:$0xff]
        %v291 = vld [vmem:[%s238 + $0x78] sm:$0xff]
        %v292 = vld [vmem:[%s238 + $0x80] sm:$0xff]
        %v293 = vld [vmem:[%s238 + $0x88] sm:$0xff]
        %v294 = vld [vmem:[%s238 + $0x90] sm:$0xff]
        %v295 = vld [vmem:[%s238 + $0x98] sm:$0xff]
        %v296 = vld [vmem:[%s238 + $0xa0] sm:$0xff]
        %v297 = vld [vmem:[%s238 + $0xa8] sm:$0xff]
        %v298 = vld [vmem:[%s238 + $0xb0] sm:$0xff]
        %v299 = vld [vmem:[%s238 + $0xb8] sm:$0xff]
        %v300 = vld [vmem:[%s238 + $0xc0] sm:$0xff]
        %v301 = vld [vmem:[%s238 + $0xc8] sm:$0xff]
        %v302 = vld [vmem:[%s238 + $0xd0] sm:$0xff]
        %v303 = vld [vmem:[%s238 + $0xd8] sm:$0xff]
        %v304 = vld [vmem:[%s238 + $0xe0] sm:$0xff]
        %v305 = vld [vmem:[%s238 + $0xe8] sm:$0xff]
        %v306 = vld [vmem:[%s238 + $0xf0] sm:$0xff]
        %v307 = vld [vmem:[%s238 + $0xf8] sm:$0xff]
        %v308 = vmul.f32 %v276, %v276
        %v309 = vmul.f32 %v277, %v277
        %v310 = vmul.f32 %v278, %v278
        %v311 = vmul.f32 %v279, %v279
        %v312 = vmul.f32 %v280, %v280
        %v313 = vmul.f32 %v281, %v281
        %v314 = vmul.f32 %v282, %v282
        %v315 = vmul.f32 %v283, %v283
        %v316 = vmul.f32 %v284, %v284
        %v317 = vmul.f32 %v285, %v285
        %v318 = vmul.f32 %v286, %v286
        %v319 = vmul.f32 %v287, %v287
        %v320 = vmul.f32 %v288, %v288
        %v321 = vmul.f32 %v289, %v289
        %v322 = vmul.f32 %v290, %v290
        %v323 = vmul.f32 %v291, %v291
        %v324 = vmul.f32 %v292, %v292
        %v325 = vmul.f32 %v293, %v293
        %v326 = vmul.f32 %v294, %v294
        %v327 = vmul.f32 %v295, %v295
        %v328 = vmul.f32 %v296, %v296
        %v329 = vmul.f32 %v297, %v297
        %v330 = vmul.f32 %v298, %v298
        %v331 = vmul.f32 %v299, %v299
        %v332 = vmul.f32 %v300, %v300
        %v333 = vmul.f32 %v301, %v301
        %v334 = vmul.f32 %v302, %v302
        %v335 = vmul.f32 %v303, %v303
        %v336 = vmul.f32 %v304, %v304
        %v337 = vmul.f32 %v305, %v305
        %v338 = vmul.f32 %v306, %v306
        %v339 = vmul.f32 %v307, %v307
        %v340 = vadd.f32 %v308, %v309
        %341 = vadd.xlane.f32.xlu0 %v340
        %v342 = vpop.xlane.xlu0 %341
        %v343 = vadd.f32 %v310, %v311
        %344 = vadd.xlane.f32.xlu0 %v343
        %v345 = vpop.xlane.xlu0 %344
        %v346 = vadd.f32 %v312, %v313
        %347 = vadd.xlane.f32.xlu0 %v346
        %v348 = vpop.xlane.xlu0 %347
        %v349 = vadd.f32 %v314, %v315
        %350 = vadd.xlane.f32.xlu0 %v349
        %v351 = vpop.xlane.xlu0 %350
        %v352 = vadd.f32 %v316, %v317
        %353 = vadd.xlane.f32.xlu0 %v352
        %v354 = vpop.xlane.xlu0 %353
        %v355 = vadd.f32 %v318, %v319
        %356 = vadd.xlane.f32.xlu0 %v355
        %v357 = vpop.xlane.xlu0 %356
        %v358 = vadd.f32 %v320, %v321
        %359 = vadd.xlane.f32.xlu0 %v358
        %v360 = vpop.xlane.xlu0 %359
        %v361 = vadd.f32 %v322, %v323
        %362 = vadd.xlane.f32.xlu0 %v361
        %v363 = vpop.xlane.xlu0 %362
        %v364 = vadd.f32 %v324, %v325
        %365 = vadd.xlane.f32.xlu0 %v364
        %v366 = vpop.xlane.xlu0 %365
        %v367 = vadd.f32 %v326, %v327
        %368 = vadd.xlane.f32.xlu0 %v367
        %v369 = vpop.xlane.xlu0 %368
        %v370 = vadd.f32 %v328, %v329
        %371 = vadd.xlane.f32.xlu0 %v370
        %v372 = vpop.xlane.xlu0 %371
        %v373 = vadd.f32 %v330, %v331
        %374 = vadd.xlane.f32.xlu0 %v373
        %v375 = vpop.xlane.xlu0 %374
        %v376 = vadd.f32 %v332, %v333
        %377 = vadd.xlane.f32.xlu0 %v376
        %v378 = vpop.xlane.xlu0 %377
        %v379 = vadd.f32 %v334, %v335
        %380 = vadd.xlane.f32.xlu0 %v379
        %v381 = vpop.xlane.xlu0 %380
        %v382 = vadd.f32 %v336, %v337
        %383 = vadd.xlane.f32.xlu0 %v382
        %v384 = vpop.xlane.xlu0 %383
        %v385 = vadd.f32 %v338, %v339
        %386 = vadd.xlane.f32.xlu0 %v385
        %v387 = vpop.xlane.xlu0 %386
        %v388 = vmax.f32 %v342, 1e-24
        %v389 = vmax.f32 %v345, 1e-24
        %v390 = vmax.f32 %v348, 1e-24
        %v391 = vmax.f32 %v351, 1e-24
        %v392 = vmax.f32 %v354, 1e-24
        %v393 = vmax.f32 %v357, 1e-24
        %v394 = vmax.f32 %v360, 1e-24
        %v395 = vmax.f32 %v363, 1e-24
        %v396 = vmax.f32 %v366, 1e-24
        %v397 = vmax.f32 %v369, 1e-24
        %v398 = vmax.f32 %v372, 1e-24
        %v399 = vmax.f32 %v375, 1e-24
        %v400 = vmax.f32 %v378, 1e-24
        %v401 = vmax.f32 %v381, 1e-24
        %v402 = vmax.f32 %v384, 1e-24
        %v403 = vmax.f32 %v387, 1e-24
        %v404 = vrsqrt.pop %v388
        %v405 = vrsqrt.pop %v389
        %v406 = vrsqrt.pop %v390
        %v407 = vrsqrt.pop %v391
        %v408 = vrsqrt.pop %v392
        %v409 = vrsqrt.pop %v393
        %v410 = vrsqrt.pop %v394
        %v411 = vrsqrt.pop %v395
        %v412 = vrsqrt.pop %v396
        %v413 = vrsqrt.pop %v397
        %v414 = vrsqrt.pop %v398
        %v415 = vrsqrt.pop %v399
        %v416 = vrsqrt.pop %v400
        %v417 = vrsqrt.pop %v401
        %v418 = vrsqrt.pop %v402
        %v419 = vrsqrt.pop %v403
        %v420 = vmul.f32 %v276, %v404
        %v421 = vmul.f32 %v277, %v404
        %v422 = vmul.f32 %v278, %v405
        %v423 = vmul.f32 %v279, %v405
        %v424 = vmul.f32 %v280, %v406
        %v425 = vmul.f32 %v281, %v406
        %v426 = vmul.f32 %v282, %v407
        %v427 = vmul.f32 %v283, %v407
        %v428 = vmul.f32 %v284, %v408
        %v429 = vmul.f32 %v285, %v408
        %v430 = vmul.f32 %v286, %v409
        %v431 = vmul.f32 %v287, %v409
        %v432 = vmul.f32 %v288, %v410
        %v433 = vmul.f32 %v289, %v410
        %v434 = vmul.f32 %v290, %v411
        %v435 = vmul.f32 %v291, %v411
        %v436 = vmul.f32 %v292, %v412
        %v437 = vmul.f32 %v293, %v412
        %v438 = vmul.f32 %v294, %v413
        %v439 = vmul.f32 %v295, %v413
        %v440 = vmul.f32 %v296, %v414
        %v441 = vmul.f32 %v297, %v414
        %v442 = vmul.f32 %v298, %v415
        %v443 = vmul.f32 %v299, %v415
        %v444 = vmul.f32 %v300, %v416
        %v445 = vmul.f32 %v301, %v416
        %v446 = vmul.f32 %v302, %v417
        %v447 = vmul.f32 %v303, %v417
        %v448 = vmul.f32 %v304, %v418
        %v449 = vmul.f32 %v305, %v418
        %v450 = vmul.f32 %v306, %v419
        %v451 = vmul.f32 %v307, %v419
        %v452 = vpack.c.bf16 %v422, %v420
        %v453 = vpack.c.bf16 %v423, %v421
        %v454 = vpack.c.bf16 %v426, %v424
        %v455 = vpack.c.bf16 %v427, %v425
        %v456 = vpack.c.bf16 %v430, %v428
        %v457 = vpack.c.bf16 %v431, %v429
        %v458 = vpack.c.bf16 %v434, %v432
        %v459 = vpack.c.bf16 %v435, %v433
        %v460 = vpack.c.bf16 %v438, %v436
        %v461 = vpack.c.bf16 %v439, %v437
        %v462 = vpack.c.bf16 %v442, %v440
        %v463 = vpack.c.bf16 %v443, %v441
        %v464 = vpack.c.bf16 %v446, %v444
        %v465 = vpack.c.bf16 %v447, %v445
        %v466 = vpack.c.bf16 %v450, %v448
        %v467 = vpack.c.bf16 %v451, %v449
        %v468 = vld [vmem:[#allocation5] sm:$0xf]
        %v469 = vld [vmem:[#allocation5 + $0x4] sm:$0xf]
        %v470 = vld [vmem:[#allocation5 + $0x8] sm:$0xf]
        %v471 = vld [vmem:[#allocation5 + $0xc] sm:$0xf]
        %v472 = vld [vmem:[#allocation5 + $0x10] sm:$0xf]
        %v473 = vld [vmem:[#allocation5 + $0x14] sm:$0xf]
        %v474 = vld [vmem:[#allocation5 + $0x18] sm:$0xf]
        %v475 = vld [vmem:[#allocation5 + $0x1c] sm:$0xf]
        %v476 = vld [vmem:[#allocation5 + $0x20] sm:$0xf]
        %v477 = vld [vmem:[#allocation5 + $0x24] sm:$0xf]
        %v478 = vld [vmem:[#allocation5 + $0x28] sm:$0xf]
        %v479 = vld [vmem:[#allocation5 + $0x2c] sm:$0xf]
        %v480 = vld [vmem:[#allocation5 + $0x30] sm:$0xf]
        %v481 = vld [vmem:[#allocation5 + $0x34] sm:$0xf]
        %v482 = vld [vmem:[#allocation5 + $0x38] sm:$0xf]
        %v483 = vld [vmem:[#allocation5 + $0x3c] sm:$0xf]
        %v484 = vld [vmem:[#allocation5 + $0x40] sm:$0xf]
        %v485 = vld [vmem:[#allocation5 + $0x44] sm:$0xf]
        %v486 = vld [vmem:[#allocation5 + $0x48] sm:$0xf]
        %v487 = vld [vmem:[#allocation5 + $0x4c] sm:$0xf]
        %v488 = vld [vmem:[#allocation5 + $0x50] sm:$0xf]
        %v489 = vld [vmem:[#allocation5 + $0x54] sm:$0xf]
        %v490 = vld [vmem:[#allocation5 + $0x58] sm:$0xf]
        %v491 = vld [vmem:[#allocation5 + $0x5c] sm:$0xf]
        %v492 = vld [vmem:[#allocation5 + $0x60] sm:$0xf]
        %v493 = vld [vmem:[#allocation5 + $0x64] sm:$0xf]
        %v494 = vld [vmem:[#allocation5 + $0x68] sm:$0xf]
        %v495 = vld [vmem:[#allocation5 + $0x6c] sm:$0xf]
        %v496 = vld [vmem:[#allocation5 + $0x70] sm:$0xf]
        %v497 = vld [vmem:[#allocation5 + $0x74] sm:$0xf]
        %v498 = vld [vmem:[#allocation5 + $0x78] sm:$0xf]
        %v499 = vld [vmem:[#allocation5 + $0x7c] sm:$0xf]
        %v500 = vld [vmem:[%s2] sm:$0x1]
        %v502 = vlaneseq
        %v503 = vshrl.u32 %v502, 7
        %v504 = vsub.s32 0, %v503
        %v505 = vrot.slane %v500, %v504
        %v539 = vunpack.c.l.b16 %v468
        %v540 = vunpack.c.l.b16 %v469
        %v541 = vunpack.c.l.b16 %v470
        %v542 = vunpack.c.l.b16 %v471
        %v543 = vunpack.c.l.b16 %v472
        %v544 = vunpack.c.l.b16 %v473
        %v545 = vunpack.c.l.b16 %v474
        %v546 = vunpack.c.l.b16 %v475
        %v547 = vunpack.c.l.b16 %v476
        %v548 = vunpack.c.l.b16 %v477
        %v549 = vunpack.c.l.b16 %v478
        %v550 = vunpack.c.l.b16 %v479
        %v551 = vunpack.c.l.b16 %v480
        %v552 = vunpack.c.l.b16 %v481
        %v553 = vunpack.c.l.b16 %v482
        %v554 = vunpack.c.l.b16 %v483
        %v555 = vunpack.c.l.b16 %v484
        %v556 = vunpack.c.l.b16 %v485
        %v557 = vunpack.c.l.b16 %v486
        %v558 = vunpack.c.l.b16 %v487
        %v559 = vunpack.c.l.b16 %v488
        %v560 = vunpack.c.l.b16 %v489
        %v561 = vunpack.c.l.b16 %v490
        %v562 = vunpack.c.l.b16 %v491
        %v563 = vunpack.c.l.b16 %v492
        %v564 = vunpack.c.l.b16 %v493
        %v565 = vunpack.c.l.b16 %v494
        %v566 = vunpack.c.l.b16 %v495
        %v567 = vunpack.c.l.b16 %v496
        %v568 = vunpack.c.l.b16 %v497
        %v569 = vunpack.c.l.b16 %v498
        %v570 = vunpack.c.l.b16 %v499
        %v571 = vpack.c.b16 %v540, %v539
        %v572 = vpack.c.b16 %v542, %v541
        %v573 = vpack.c.b16 %v544, %v543
        %v574 = vpack.c.b16 %v546, %v545
        %v575 = vpack.c.b16 %v548, %v547
        %v576 = vpack.c.b16 %v550, %v549
        %v577 = vpack.c.b16 %v552, %v551
        %v578 = vpack.c.b16 %v554, %v553
        %v579 = vpack.c.b16 %v556, %v555
        %v580 = vpack.c.b16 %v558, %v557
        %v581 = vpack.c.b16 %v560, %v559
        %v582 = vpack.c.b16 %v562, %v561
        %v583 = vpack.c.b16 %v564, %v563
        %v584 = vpack.c.b16 %v566, %v565
        %v585 = vpack.c.b16 %v568, %v567
        %v586 = vpack.c.b16 %v570, %v569
        %603 = vmatprep.subr.bf16.mxu0 0
        %604 = vmatpush1.bf16.msra.mxu0 %v571
        %605 = vmatprep.subr.bf16.mxu0 0
        %606 = vmatpush1.bf16.msra.mxu0 %v572
        %607 = vmatprep.subr.bf16.mxu0 0
        %608 = vmatpush1.bf16.msra.mxu0 %v573
        %609 = vmatprep.subr.bf16.mxu0 0
        %610 = vmatpush1.bf16.msra.mxu0 %v574
        %611 = vmatprep.subr.bf16.mxu0 0
        %612 = vmatpush1.bf16.msra.mxu0 %v575
        %613 = vmatprep.subr.bf16.mxu0 0
        %614 = vmatpush1.bf16.msra.mxu0 %v576
        %615 = vmatprep.subr.bf16.mxu0 0
        %616 = vmatpush1.bf16.msra.mxu0 %v577
        %617 = vmatprep.subr.bf16.mxu0 0
        %618 = vmatpush1.bf16.msra.mxu0 %v578
        %619 = vmatprep.subr.bf16.mxu0 0
        %620 = vmatpush1.bf16.msra.mxu0 %v579
        %621 = vmatprep.subr.bf16.mxu0 0
        %622 = vmatpush1.bf16.msra.mxu0 %v580
        %623 = vmatprep.subr.bf16.mxu0 0
        %624 = vmatpush1.bf16.msra.mxu0 %v581
        %625 = vmatprep.subr.bf16.mxu0 0
        %626 = vmatpush1.bf16.msra.mxu0 %v582
        %627 = vmatprep.subr.bf16.mxu0 0
        %628 = vmatpush1.bf16.msra.mxu0 %v583
        %629 = vmatprep.subr.bf16.mxu0 0
        %630 = vmatpush1.bf16.msra.mxu0 %v584
        %631 = vmatprep.subr.bf16.mxu0 0
        %632 = vmatpush1.bf16.msra.mxu0 %v585
        %633 = vmatprep.subr.bf16.mxu0 0
        %634 = vmatpush1.bf16.msra.mxu0 %v586
        %635 = vmatprep.mubr.bf16.mxu0 %v453
        %636 = vmatmul.mubr.bf16.gmra.mrb[0].mxu0 %v452
        %v637 = vpop.f32.mrb[0].mxu0
        %v638 = vadd.f32 %v505, %v637
        %v639 = vpop.f32.mrb[0].mxu0
        %v640 = vpop.f32.mrb[0].mxu0
        %v641 = vadd.f32 %v505, %v640
        %v642 = vpop.f32.mrb[0].mxu0
        %643 = vmatprep.mubr.bf16.mxu0 %v455
        %644 = vmatmul.mubr.bf16.gmra.mrb[0].mxu0 %v454
        %v645 = vpop.f32.mrb[0].mxu0
        %v646 = vadd.f32 %v505, %v645
        %v647 = vpop.f32.mrb[0].mxu0
        %v648 = vpop.f32.mrb[0].mxu0
        %v649 = vadd.f32 %v505, %v648
        %v650 = vpop.f32.mrb[0].mxu0
        %651 = vmatprep.mubr.bf16.mxu0 %v457
        %652 = vmatmul.mubr.bf16.gmra.mrb[0].mxu0 %v456
        %v653 = vpop.f32.mrb[0].mxu0
        %v654 = vadd.f32 %v505, %v653
        %v655 = vpop.f32.mrb[0].mxu0
        %v656 = vpop.f32.mrb[0].mxu0
        %v657 = vadd.f32 %v505, %v656
        %v658 = vpop.f32.mrb[0].mxu0
        %659 = vmatprep.mubr.bf16.mxu0 %v459
        %660 = vmatmul.mubr.bf16.gmra.mrb[0].mxu0 %v458
        %v661 = vpop.f32.mrb[0].mxu0
        %v662 = vadd.f32 %v505, %v661
        %v663 = vpop.f32.mrb[0].mxu0
        %v664 = vpop.f32.mrb[0].mxu0
        %v665 = vadd.f32 %v505, %v664
        %v666 = vpop.f32.mrb[0].mxu0
        %667 = vmatprep.mubr.bf16.mxu0 %v461
        %668 = vmatmul.mubr.bf16.gmra.mrb[0].mxu0 %v460
        %v669 = vpop.f32.mrb[0].mxu0
        %v670 = vadd.f32 %v505, %v669
        %v671 = vpop.f32.mrb[0].mxu0
        %v672 = vpop.f32.mrb[0].mxu0
        %v673 = vadd.f32 %v505, %v672
        %v674 = vpop.f32.mrb[0].mxu0
        %675 = vmatprep.mubr.bf16.mxu0 %v463
        %676 = vmatmul.mubr.bf16.gmra.mrb[0].mxu0 %v462
        %v677 = vpop.f32.mrb[0].mxu0
        %v678 = vadd.f32 %v505, %v677
        %v679 = vpop.f32.mrb[0].mxu0
        %v680 = vpop.f32.mrb[0].mxu0
        %v681 = vadd.f32 %v505, %v680
        %v682 = vpop.f32.mrb[0].mxu0
        %683 = vmatprep.mubr.bf16.mxu0 %v465
        %684 = vmatmul.mubr.bf16.gmra.mrb[0].mxu0 %v464
        %v685 = vpop.f32.mrb[0].mxu0
        %v686 = vadd.f32 %v505, %v685
        %v687 = vpop.f32.mrb[0].mxu0
        %v688 = vpop.f32.mrb[0].mxu0
        %v689 = vadd.f32 %v505, %v688
        %v690 = vpop.f32.mrb[0].mxu0
        %691 = vmatprep.mubr.bf16.mxu0 %v467
        %692 = vmatmul.mubr.bf16.gmra.mrb[0].mxu0 %v466
        %v693 = vpop.f32.mrb[0].mxu0
        %v694 = vadd.f32 %v505, %v693
        %v695 = vpop.f32.mrb[0].mxu0
        %v696 = vpop.f32.mrb[0].mxu0
        %v697 = vadd.f32 %v505, %v696
        %v698 = vpop.f32.mrb[0].mxu0
        %699 = vdwg.mxu0
        %v700 = vtanh.pop %v638
        %v701 = vtanh.pop %v641
        %v702 = vtanh.pop %v646
        %v703 = vtanh.pop %v649
        %v704 = vtanh.pop %v654
        %v705 = vtanh.pop %v657
        %v706 = vtanh.pop %v662
        %v707 = vtanh.pop %v665
        %v708 = vtanh.pop %v670
        %v709 = vtanh.pop %v673
        %v710 = vtanh.pop %v678
        %v711 = vtanh.pop %v681
        %v712 = vtanh.pop %v686
        %v713 = vtanh.pop %v689
        %v714 = vtanh.pop %v694
        %v715 = vtanh.pop %v697
        %v716 = vpack.c.bf16 %v701, %v700
        %v717 = vpack.c.bf16 %v703, %v702
        %v718 = vpack.c.bf16 %v705, %v704
        %v719 = vpack.c.bf16 %v707, %v706
        %v720 = vpack.c.bf16 %v709, %v708
        %v721 = vpack.c.bf16 %v711, %v710
        %v722 = vpack.c.bf16 %v713, %v712
        %v723 = vpack.c.bf16 %v715, %v714
        %v724 = vld [vmem:[#allocation7] sm:$0xf]
        %v725 = vld [vmem:[#allocation7 + $0x4] sm:$0xf]
        %v726 = vld [vmem:[#allocation7 + $0x8] sm:$0xf]
        %v727 = vld [vmem:[#allocation7 + $0xc] sm:$0xf]
        %v728 = vld [vmem:[#allocation7 + $0x10] sm:$0xf]
        %v729 = vld [vmem:[#allocation7 + $0x14] sm:$0xf]
        %v730 = vld [vmem:[#allocation7 + $0x18] sm:$0xf]
        %v731 = vld [vmem:[#allocation7 + $0x1c] sm:$0xf]
        %v732 = vld [vmem:[#allocation7 + $0x20] sm:$0xf]
        %v733 = vld [vmem:[#allocation7 + $0x24] sm:$0xf]
        %v734 = vld [vmem:[#allocation7 + $0x28] sm:$0xf]
        %v735 = vld [vmem:[#allocation7 + $0x2c] sm:$0xf]
        %v736 = vld [vmem:[#allocation7 + $0x30] sm:$0xf]
        %v737 = vld [vmem:[#allocation7 + $0x34] sm:$0xf]
        %v738 = vld [vmem:[#allocation7 + $0x38] sm:$0xf]
        %v739 = vld [vmem:[#allocation7 + $0x3c] sm:$0xf]
        %v740 = vld [vmem:[%s4] sm:$0x1]
        %v742 = vlaneseq
        %v743 = vshrl.u32 %v742, 7
        %v744 = vsub.s32 0, %v743
        %v745 = vrot.slane %v740, %v744
        %v763 = vunpack.c.l.b16 %v724
        %v764 = vunpack.c.l.b16 %v725
        %v765 = vunpack.c.l.b16 %v726
        %v766 = vunpack.c.l.b16 %v727
        %v767 = vunpack.c.l.b16 %v728
        %v768 = vunpack.c.l.b16 %v729
        %v769 = vunpack.c.l.b16 %v730
        %v770 = vunpack.c.l.b16 %v731
        %v771 = vunpack.c.l.b16 %v732
        %v772 = vunpack.c.l.b16 %v733
        %v773 = vunpack.c.l.b16 %v734
        %v774 = vunpack.c.l.b16 %v735
        %v775 = vunpack.c.l.b16 %v736
        %v776 = vunpack.c.l.b16 %v737
        %v777 = vunpack.c.l.b16 %v738
        %v778 = vunpack.c.l.b16 %v739
        %v779 = vpack.c.b16 %v764, %v763
        %v780 = vpack.c.b16 %v766, %v765
        %v781 = vpack.c.b16 %v768, %v767
        %v782 = vpack.c.b16 %v770, %v769
        %v783 = vpack.c.b16 %v772, %v771
        %v784 = vpack.c.b16 %v774, %v773
        %v785 = vpack.c.b16 %v776, %v775
        %v786 = vpack.c.b16 %v778, %v777
        %795 = vmatprep.subr.bf16.mxu0 0
        %796 = vmatpush1.bf16.msra.mxu0 %v779
        %797 = vmatprep.subr.bf16.mxu0 0
        %798 = vmatpush1.bf16.msra.mxu0 %v780
        %799 = vmatprep.subr.bf16.mxu0 0
        %800 = vmatpush1.bf16.msra.mxu0 %v781
        %801 = vmatprep.subr.bf16.mxu0 0
        %802 = vmatpush1.bf16.msra.mxu0 %v782
        %803 = vmatprep.subr.bf16.mxu0 0
        %804 = vmatpush1.bf16.msra.mxu0 %v783
        %805 = vmatprep.subr.bf16.mxu0 0
        %806 = vmatpush1.bf16.msra.mxu0 %v784
        %807 = vmatprep.subr.bf16.mxu0 0
        %808 = vmatpush1.bf16.msra.mxu0 %v785
        %809 = vmatprep.subr.bf16.mxu0 0
        %810 = vmatpush1.bf16.msra.mxu0 %v786
        %811 = vmatprep.subr.bf16.mxu0 0
        %812 = vmatpush1.bf16.msra.mxu0 0
        %813 = vmatprep.subr.bf16.mxu0 0
        %814 = vmatpush1.bf16.msra.mxu0 0
        %815 = vmatprep.subr.bf16.mxu0 0
        %816 = vmatpush1.bf16.msra.mxu0 0
        %817 = vmatprep.subr.bf16.mxu0 0
        %818 = vmatpush1.bf16.msra.mxu0 0
        %819 = vmatprep.subr.bf16.mxu0 0
        %820 = vmatpush1.bf16.msra.mxu0 0
        %821 = vmatprep.subr.bf16.mxu0 0
        %822 = vmatpush1.bf16.msra.mxu0 0
        %823 = vmatprep.subr.bf16.mxu0 0
        %824 = vmatpush1.bf16.msra.mxu0 0
        %825 = vmatprep.subr.bf16.mxu0 0
        %826 = vmatpush1.bf16.msra.mxu0 0
        %827 = vmatprep.mubr.bf16.mxu0 0
        %828 = vmatmul.mubr.bf16.gmra.mrb[0].mxu0 %v716
        %v829 = vpop.f32.mrb[0].mxu0
        %v830 = vadd.f32 %v745, %v829
        %v831 = vpop.f32.mrb[0].mxu0
        %v832 = vpop.f32.mrb[0].mxu0
        %v833 = vadd.f32 %v745, %v832
        %v834 = vpop.f32.mrb[0].mxu0
        %835 = vmatprep.mubr.bf16.mxu0 0
        %836 = vmatmul.mubr.bf16.gmra.mrb[0].mxu0 %v717
        %v837 = vpop.f32.mrb[0].mxu0
        %v838 = vadd.f32 %v745, %v837
        %v839 = vpop.f32.mrb[0].mxu0
        %v840 = vpop.f32.mrb[0].mxu0
        %v841 = vadd.f32 %v745, %v840
        %v842 = vpop.f32.mrb[0].mxu0
        %843 = vmatprep.mubr.bf16.mxu0 0
        %844 = vmatmul.mubr.bf16.gmra.mrb[0].mxu0 %v718
        %v845 = vpop.f32.mrb[0].mxu0
        %v846 = vadd.f32 %v745, %v845
        %v847 = vpop.f32.mrb[0].mxu0
        %v848 = vpop.f32.mrb[0].mxu0
        %v849 = vadd.f32 %v745, %v848
        %v850 = vpop.f32.mrb[0].mxu0
        %851 = vmatprep.mubr.bf16.mxu0 0
        %852 = vmatmul.mubr.bf16.gmra.mrb[0].mxu0 %v719
        %v853 = vpop.f32.mrb[0].mxu0
        %v854 = vadd.f32 %v745, %v853
        %v855 = vpop.f32.mrb[0].mxu0
        %v856 = vpop.f32.mrb[0].mxu0
        %v857 = vadd.f32 %v745, %v856
        %v858 = vpop.f32.mrb[0].mxu0
        %859 = vmatprep.mubr.bf16.mxu0 0
        %860 = vmatmul.mubr.bf16.gmra.mrb[0].mxu0 %v720
        %v861 = vpop.f32.mrb[0].mxu0
        %v862 = vadd.f32 %v745, %v861
        %v863 = vpop.f32.mrb[0].mxu0
        %v864 = vpop.f32.mrb[0].mxu0
        %v865 = vadd.f32 %v745, %v864
        %v866 = vpop.f32.mrb[0].mxu0
        %867 = vmatprep.mubr.bf16.mxu0 0
        %868 = vmatmul.mubr.bf16.gmra.mrb[0].mxu0 %v721
        %v869 = vpop.f32.mrb[0].mxu0
        %v870 = vadd.f32 %v745, %v869
        %v871 = vpop.f32.mrb[0].mxu0
        %v872 = vpop.f32.mrb[0].mxu0
        %v873 = vadd.f32 %v745, %v872
        %v874 = vpop.f32.mrb[0].mxu0
        %875 = vmatprep.mubr.bf16.mxu0 0
        %876 = vmatmul.mubr.bf16.gmra.mrb[0].mxu0 %v722
        %v877 = vpop.f32.mrb[0].mxu0
        %v878 = vadd.f32 %v745, %v877
        %v879 = vpop.f32.mrb[0].mxu0
        %v880 = vpop.f32.mrb[0].mxu0
        %v881 = vadd.f32 %v745, %v880
        %v882 = vpop.f32.mrb[0].mxu0
        %883 = vmatprep.mubr.bf16.mxu0 0
        %884 = vmatmul.mubr.bf16.gmra.mrb[0].mxu0 %v723
        %v885 = vpop.f32.mrb[0].mxu0
        %v886 = vadd.f32 %v745, %v885
        %v887 = vpop.f32.mrb[0].mxu0
        %v888 = vpop.f32.mrb[0].mxu0
        %v889 = vadd.f32 %v745, %v888
        %v890 = vpop.f32.mrb[0].mxu0
        %891 = vdwg.mxu0
        %892 = vst [vmem:[%s272] sm:$0xff] %v830
        %893 = vst [vmem:[%s272 + $0x8] sm:$0xff] %v833
        %894 = vst [vmem:[%s272 + $0x10] sm:$0xff] %v838
        %895 = vst [vmem:[%s272 + $0x18] sm:$0xff] %v841
        %896 = vst [vmem:[%s272 + $0x20] sm:$0xff] %v846
        %897 = vst [vmem:[%s272 + $0x28] sm:$0xff] %v849
        %898 = vst [vmem:[%s272 + $0x30] sm:$0xff] %v854
        %899 = vst [vmem:[%s272 + $0x38] sm:$0xff] %v857
        %900 = vst [vmem:[%s272 + $0x40] sm:$0xff] %v862
        %901 = vst [vmem:[%s272 + $0x48] sm:$0xff] %v865
        %902 = vst [vmem:[%s272 + $0x50] sm:$0xff] %v870
        %903 = vst [vmem:[%s272 + $0x58] sm:$0xff] %v873
        %904 = vst [vmem:[%s272 + $0x60] sm:$0xff] %v878
        %905 = vst [vmem:[%s272 + $0x68] sm:$0xff] %v881
        %906 = vst [vmem:[%s272 + $0x70] sm:$0xff] %v886
        %907 = vst [vmem:[%s272 + $0x78] sm:$0xff] %v889
        %s908 = sand.u32 %s141, 1
        %s909 = scalar_lea.sflag [#allocation4], %s908
        %s910 = sand.u32 %s141, 1
        %s911 = smul.addr %s910, 128
        %s912 = scalar_lea.vmem [#allocation8], %s911
        // Predicated region
        $region53: #{tpu_custom_call.1} parent=39 // pred_check
          %p913 = pneg %p151
        $region54: #{tpu_custom_call.1} parent=39 // pred_check_branch
          %915 = sbr.rel (%p913) target = $region56
        $region55: #{tpu_custom_call.1} parent=39 // pred_region
          %s916 = smul.u32 16, %s23
          %s918 = ssub.s32 2048, 2048
          %919 = vsyncadd %s909, %s918
          %s920 = smul.addr %s916, 128
          %s921 = scalar_lea.hbm %s5, %s920
          %s922 = sshll.u32 %s912, 4
          %s923 = int_to_ptr.vmem [resolvable:$true] %s922
          %928 = dma.vmem_to_hbm [thread:$0]  %s923, 2048, %s921, %s909, 128, 128, 8
        $region56: #{tpu_custom_call.1} parent=39 // pred_fallthru
          _
      $region40: #{tpu_custom_call.1} parent=5 // pred_fallthru
        _
      %p929 = scmp.le.s32.totalorder 2, %s18
      // Predicated region
      $region57: #{tpu_custom_call.1} parent=5 // pred_check
        %p930 = pneg %p929
      $region58: #{tpu_custom_call.1} parent=5 // pred_check_branch
        %932 = sbr.rel (%p930) target = $region60
      $region59: #{tpu_custom_call.1} parent=5 // pred_region
        %s933 = ssub.s32 %s18, 2
        // Predicated region
        $region61: #{tpu_custom_call.1} parent=59 // pred_check
          %p934 = pneg %p157
        $region62: #{tpu_custom_call.1} parent=59 // pred_check_branch
          %936 = sbr.rel (%p934) target = $region64
        $region63: #{tpu_custom_call.1} parent=59 // pred_region
          %s937 = sand.u32 %s142, 1
          %s938 = scalar_lea.sflag [#allocation4], %s937
          %s939 = sand.u32 %s142, 1
          %s940 = smul.addr %s939, 128
          %s941 = scalar_lea.vmem [#allocation8], %s940
          %942 = dma.done %s938, 2048
        $region64: #{tpu_custom_call.1} parent=59 // pred_fallthru
          _
      $region60: #{tpu_custom_call.1} parent=5 // pred_fallthru
        _
    $region6: #{tpu_custom_call.1} parent=1 // loop_footer
      %s22 = sadd.s32 1, %s18
    $region7: #{tpu_custom_call.1} parent=1 // loop_footer_branch
      %17 = sbr.rel target = $region3
    $region8: #{tpu_custom_call.1} parent=1 // loop_exit
      _
    %943 = vsyncpa [#allocation3], 1
    %s944 = scalar_lea.sflag [#allocation3], 1
    %945 = vsyncpa %s944, 1
    %946 = vsyncpa [#allocation6], 1
    %947 = vsyncpa [#allocation4], 1
    %s948 = scalar_lea.sflag [#allocation4], 1
    %949 = vsyncpa %s948, 1

// kernel: tpu_custom_call.1
$region0: #{tpu_custom_call.1}
  #allocation0 [shape = 'u32[]', space=smem, size = 0x4, offset = 0x4, fixed_abs, tag = 'smem constant byte address 0x4 - core index']
  #allocation1 [shape = 'u32[144,128]{1,0:T(1,128)}', space=vmem, size = 0x12000, scoped, tag = 'internal scratch']
  %s0 = inlined_call_operand.hbm [shape: f32[256,256], index: 0, kind: input, shape index: {}]
  %s1 = inlined_call_operand.hbm [shape: bf16[256,128], index: 1, kind: input, shape index: {}]
  %s2 = inlined_call_operand.vmem [shape: f32[1,128], index: 2, kind: input, shape index: {}]
  %s3 = inlined_call_operand.hbm [shape: bf16[128,128], index: 3, kind: input, shape index: {}]
  %s4 = inlined_call_operand.vmem [shape: f32[1,128], index: 4, kind: input, shape index: {}]
  %s5 = inlined_call_operand.hbm [shape: f32[256,128], index: 5, kind: output, shape index: {}]
  %s6 = sld [smem:[#allocation0]]
  $region65: #{tpu_custom_call.1} parent=0
    _
  %s8 = ssub.s32 1, %s6
  %s9 = scalar_select 0, %s8, %s6
  $region1: #{tpu_custom_call.1} parent=0
    #allocation2 [shape = 'u8[262144]{0}', space=vmem, size = 0x40000, scoped, tag = 'input window, operand 0']
    #allocation3 [shape = 's32[2]{0}', space=sflag, size = 0x8, scoped, tag = 'scoped memory for tpu_custom_call.1']
    #allocation4 [shape = 's32[2]{0}', space=sflag, size = 0x8, scoped, tag = 'scoped memory for tpu_custom_call.1']
    #allocation5 [shape = 'u8[65536]{0}', space=vmem, size = 0x10000, scoped, tag = 'input window, operand 1, single buffered']
    #allocation6 [shape = 's32[1]{0}', space=sflag, size = 0x4, scoped, tag = 'scoped memory for tpu_custom_call.1']
    #allocation7 [shape = 'u8[32768]{0}', space=vmem, size = 0x8000, scoped, tag = 'input window, operand 3, single buffered']
    #allocation8 [shape = 'u8[131072]{0}', space=vmem, size = 0x20000, scoped, tag = 'output window, operand 0']
    %10 = vsyncpa [#allocation3], 0
    %s11 = scalar_lea.sflag [#allocation3], 1
    %12 = vsyncpa %s11, 0
    %13 = vsyncpa [#allocation6], 0
    %14 = vsyncpa [#allocation4], 0
    %s15 = scalar_lea.sflag [#allocation4], 1
    %16 = vsyncpa %s15, 0
    loop: start=0, step=1, limit=4
    $region2: #{tpu_custom_call.1} parent=1 // loop_pre_header
      _
    $region3: #{tpu_custom_call.1} parent=1 // loop_header
      %s18 = sphi 0, %s22
      %p19 = scmp.ge.s32.totalorder %s18, 4
      %s28 = sphi 0, %s30
      %s31 = sphi 0, %s28
      %s32 = sphi 0, %s31
      %s48 = sphi 0, %s32
      %s52 = sphi 0, %s52
      %s54 = sphi 0, %s52
      %s55 = sphi 0, %s54
      %s69 = sphi 0, %s55
      %s73 = sphi 0, %s73
      %s75 = sphi 0, %s73
      %s76 = sphi 0, %s75
      %s90 = sphi 0, %s76
      %s94 = sphi 0, %s94
      %s96 = sphi 0, %s94
      %s97 = sphi 0, %s96
      %s111 = sphi 0, %s97
      %s115 = sphi 0, %s115
      %s117 = sphi 0, %s115
      %s118 = sphi 0, %s117
      %s132 = sphi 0, %s118
      %s138 = sphi 0, %s140
      %s141 = sphi 0, %s138
      %s142 = sphi 0, %s141
      %s158 = sphi 0, %s142
    $region4: #{tpu_custom_call.1} parent=1 // loop_header_branch
      %21 = sbr.rel (%p19) target = $region8
    $region5: #{tpu_custom_call.1} parent=1 // loop_body
      %s23 = ssub.s32 %s18, 1
      %s24 = ssub.s32 %s18, 2
      %s25 = sadd.s32 %s18, 1
      %s26 = ssub.s32 %s18, %s25
      %p27 = scmp.eq.s32.totalorder %s26, 0
      %s29 = sadd.s32 %s28, 1
      %s30 = scalar_select %p27, %s28, %s29
      %p33 = pneg %p27
      %p34 = scmp.eq.s32.totalorder %s18, 1
      %p35 = por %p33, %p34
      %p36 = scmp.ne.s32.totalorder %s28, %s31
      %p37 = scmp.eq.s32.totalorder %s18, 0
      %p38 = por %p36, %p37
      %p39 = scmp.ne.s32.totalorder %s28, %s31
      %p40 = scmp.eq.s32.totalorder %s23, 1
      %p41 = por %p39, %p40
      %p42 = scmp.ne.s32.totalorder %s31, %s32
      %p43 = scmp.eq.s32.totalorder %s23, 0
      %p44 = por %p42, %p43
      %p45 = scmp.ne.s32.totalorder %s31, %s32
      %p46 = scmp.eq.s32.totalorder %s24, 1
      %p47 = por %p45, %p46
      %p49 = scmp.ne.s32.totalorder %s32, %s48
      %p50 = scmp.eq.s32.totalorder %s24, 0
      %p51 = por %p49, %p50
      %s53 = sadd.s32 %s52, 1
      %p56 = scmp.eq.s32.totalorder %s18, 1
      %p57 = scmp.ne.s32.totalorder %s52, %s54
      %p58 = scmp.eq.s32.totalorder %s18, 0
      %p59 = por %p57, %p58
      %p60 = scmp.ne.s32.totalorder %s52, %s54
      %p61 = scmp.eq.s32.totalorder %s23, 1
      %p62 = por %p60, %p61
      %p63 = scmp.ne.s32.totalorder %s54, %s55
      %p64 = scmp.eq.s32.totalorder %s23, 0
      %p65 = por %p63, %p64
      %p66 = scmp.ne.s32.totalorder %s54, %s55
      %p67 = scmp.eq.s32.totalorder %s24, 1
      %p68 = por %p66, %p67
      %p70 = scmp.ne.s32.totalorder %s55, %s69
      %p71 = scmp.eq.s32.totalorder %s24, 0
      %p72 = por %p70, %p71
      %s74 = sadd.s32 %s73, 1
      %p77 = scmp.eq.s32.totalorder %s18, 1
      %p78 = scmp.ne.s32.totalorder %s73, %s75
      %p79 = scmp.eq.s32.totalorder %s18, 0
      %p80 = por %p78, %p79
      %p81 = scmp.ne.s32.totalorder %s73, %s75
      %p82 = scmp.eq.s32.totalorder %s23, 1
      %p83 = por %p81, %p82
      %p84 = scmp.ne.s32.totalorder %s75, %s76
      %p85 = scmp.eq.s32.totalorder %s23, 0
      %p86 = por %p84, %p85
      %p87 = scmp.ne.s32.totalorder %s75, %s76
      %p88 = scmp.eq.s32.totalorder %s24, 1
      %p89 = por %p87, %p88
      %p91 = scmp.ne.s32.totalorder %s76, %s90
      %p92 = scmp.eq.s32.totalorder %s24, 0
      %p93 = por %p91, %p92
      %s95 = sadd.s32 %s94, 1
      %p98 = scmp.eq.s32.totalorder %s18, 1
      %p99 = scmp.ne.s32.totalorder %s94, %s96
      %p100 = scmp.eq.s32.totalorder %s18, 0
      %p101 = por %p99, %p100
      %p102 = scmp.ne.s32.totalorder %s94, %s96
      %p103 = scmp.eq.s32.totalorder %s23, 1
      %p104 = por %p102, %p103
      %p105 = scmp.ne.s32.totalorder %s96, %s97
      %p106 = scmp.eq.s32.totalorder %s23, 0
      %p107 = por %p105, %p106
      %p108 = scmp.ne.s32.totalorder %s96, %s97
      %p109 = scmp.eq.s32.totalorder %s24, 1
      %p110 = por %p108, %p109
      %p112 = scmp.ne.s32.totalorder %s97, %s111
      %p113 = scmp.eq.s32.totalorder %s24, 0
      %p114 = por %p112, %p113
      %s116 = sadd.s32 %s115, 1
      %p119 = scmp.eq.s32.totalorder %s18, 1
      %p120 = scmp.ne.s32.totalorder %s115, %s117
      %p121 = scmp.eq.s32.totalorder %s18, 0
      %p122 = por %p120, %p121
      %p123 = scmp.ne.s32.totalorder %s115, %s117
      %p124 = scmp.eq.s32.totalorder %s23, 1
      %p125 = por %p123, %p124
      %p126 = scmp.ne.s32.totalorder %s117, %s118
      %p127 = scmp.eq.s32.totalorder %s23, 0
      %p128 = por %p126, %p127
      %p129 = scmp.ne.s32.totalorder %s117, %s118
      %p130 = scmp.eq.s32.totalorder %s24, 1
      %p131 = por %p129, %p130
      %p133 = scmp.ne.s32.totalorder %s118, %s132
      %p134 = scmp.eq.s32.totalorder %s24, 0
      %p135 = por %p133, %p134
      %s136 = ssub.s32 %s18, %s25
      %p137 = scmp.eq.s32.totalorder %s136, 0
      %s139 = sadd.s32 %s138, 1
      %s140 = scalar_select %p137, %s138, %s139
      %p143 = pneg %p137
      %p144 = scmp.eq.s32.totalorder %s18, 1
      %p145 = por %p143, %p144
      %p146 = scmp.ne.s32.totalorder %s138, %s141
      %p147 = scmp.eq.s32.totalorder %s18, 0
      %p148 = por %p146, %p147
      %p149 = scmp.ne.s32.totalorder %s138, %s141
      %p150 = scmp.eq.s32.totalorder %s23, 1
      %p151 = por %p149, %p150
      %p152 = scmp.ne.s32.totalorder %s141, %s142
      %p153 = scmp.eq.s32.totalorder %s23, 0
      %p154 = por %p152, %p153
      %p155 = scmp.ne.s32.totalorder %s141, %s142
      %p156 = scmp.eq.s32.totalorder %s24, 1
      %p157 = por %p155, %p156
      %p159 = scmp.ne.s32.totalorder %s142, %s158
      %p160 = scmp.eq.s32.totalorder %s24, 0
      %p161 = por %p159, %p160
      %p162 = scmp.le.s32.totalorder 1, %s18
      %p163 = scmp.lt.s32.totalorder %s18, 3
      %p164 = pnand %p162, %p163
      %p165 = pneg %p164
      // Predicated region
      $region9: #{tpu_custom_call.1} parent=5 // pred_check
        _
      $region10: #{tpu_custom_call.1} parent=5 // pred_check_branch
        %167 = sbr.rel (%p164) target = $region12
      $region11: #{tpu_custom_call.1} parent=5 // pred_region
        %s168 = ssub.s32 %s18, 1
        // Predicated region
        $region13: #{tpu_custom_call.1} parent=11 // pred_check
          %p169 = pneg %p65
        $region14: #{tpu_custom_call.1} parent=11 // pred_check_branch
          %171 = sbr.rel (%p169) target = $region16
        $region15: #{tpu_custom_call.1} parent=11 // pred_region
          %s173 = ssub.s32 2048, 2048
          %174 = vsyncadd [#allocation6], %s173
          %s175 = sshll.u32 [#allocation5], 4
          %s176 = int_to_ptr.vmem [resolvable:$true] %s175
          %181 = dma.hbm_to_vmem [thread:$0]  %s1, 2048, %s176, [#allocation6], 64, 64, 4
        $region16: #{tpu_custom_call.1} parent=11 // pred_fallthru
          _
        // Predicated region
        $region17: #{tpu_custom_call.1} parent=11 // pred_check
          %p182 = pneg %p86
        $region18: #{tpu_custom_call.1} parent=11 // pred_check_branch
          %184 = sbr.rel (%p182) target = $region20
        $region19: #{tpu_custom_call.1} parent=11 // pred_region
          _
        $region20: #{tpu_custom_call.1} parent=11 // pred_fallthru
          _
        // Predicated region
        $region21: #{tpu_custom_call.1} parent=11 // pred_check
          %p185 = pneg %p107
        $region22: #{tpu_custom_call.1} parent=11 // pred_check_branch
          %187 = sbr.rel (%p185) target = $region24
        $region23: #{tpu_custom_call.1} parent=11 // pred_region
          %s189 = ssub.s32 1024, 1024
          %190 = vsyncadd [#allocation6], %s189
          %s191 = sshll.u32 [#allocation7], 4
          %s192 = int_to_ptr.vmem [resolvable:$true] %s191
          %197 = dma.hbm_to_vmem [thread:$0]  %s3, 1024, %s192, [#allocation6], 64, 64, 4
        $region24: #{tpu_custom_call.1} parent=11 // pred_fallthru
          _
        // Predicated region
        $region25: #{tpu_custom_call.1} parent=11 // pred_check
          %p198 = pneg %p128
        $region26: #{tpu_custom_call.1} parent=11 // pred_check_branch
          %200 = sbr.rel (%p198) target = $region28
        $region27: #{tpu_custom_call.1} parent=11 // pred_region
          _
        $region28: #{tpu_custom_call.1} parent=11 // pred_fallthru
          _
      $region12: #{tpu_custom_call.1} parent=5 // pred_fallthru
        _
      %p201 = scmp.lt.s32.totalorder %s18, 2
      // Predicated region
      $region29: #{tpu_custom_call.1} parent=5 // pred_check
        %p202 = pneg %p201
      $region30: #{tpu_custom_call.1} parent=5 // pred_check_branch
        %204 = sbr.rel (%p202) target = $region32
      $region31: #{tpu_custom_call.1} parent=5 // pred_region
        // Predicated region
        $region33: #{tpu_custom_call.1} parent=31 // pred_check
          %p205 = pneg %p38
        $region34: #{tpu_custom_call.1} parent=31 // pred_check_branch
          %207 = sbr.rel (%p205) target = $region36
        $region35: #{tpu_custom_call.1} parent=31 // pred_region
          %s208 = sand.u32 %s28, 1
          %s209 = scalar_lea.sflag [#allocation3], %s208
          %s210 = sand.u32 %s28, 1
          %s211 = smul.addr %s210, 256
          %s212 = scalar_lea.vmem [#allocation2], %s211
          %s213 = smul.u32 16, %s18
          %s215 = ssub.s32 4096, 4096
          %216 = vsyncadd %s209, %s215
          %s217 = smul.addr %s213, 2
          %s218 = smul.addr %s217, 128
          %s219 = scalar_lea.hbm %s0, %s218
          %s220 = sshll.u32 %s212, 4
          %s221 = int_to_ptr.vmem [resolvable:$true] %s220
          %226 = dma.hbm_to_vmem [thread:$0]  %s219, 4096, %s221, %s209, 256, 256, 16
        $region36: #{tpu_custom_call.1} parent=31 // pred_fallthru
          _
      $region32: #{tpu_custom_call.1} parent=5 // pred_fallthru
        _
      %p227 = scmp.le.s32.totalorder 1, %s18
      %p228 = scmp.lt.s32.totalorder %s18, 3
      %p229 = pnand %p227, %p228
      %p230 = pneg %p229
      // Predicated region
      $region37: #{tpu_custom_call.1} parent=5 // pred_check
        _
      $region38: #{tpu_custom_call.1} parent=5 // pred_check_branch
        %232 = sbr.rel (%p229) target = $region40
      $region39: #{tpu_custom_call.1} parent=5 // pred_region
        %s233 = ssub.s32 %s18, 1
        %s234 = sand.u32 %s31, 1
        %s235 = scalar_lea.sflag [#allocation3], %s234
        %s236 = sand.u32 %s31, 1
        %s237 = smul.addr %s236, 256
        %s238 = scalar_lea.vmem [#allocation2], %s237
        // Predicated region
        $region41: #{tpu_custom_call.1} parent=39 // pred_check
          %p239 = pneg %p44
        $region42: #{tpu_custom_call.1} parent=39 // pred_check_branch
          %241 = sbr.rel (%p239) target = $region44
        $region43: #{tpu_custom_call.1} parent=39 // pred_region
          %242 = dma.done %s235, 4096
        $region44: #{tpu_custom_call.1} parent=39 // pred_fallthru
          _
        // Predicated region
        $region45: #{tpu_custom_call.1} parent=39 // pred_check
          %p243 = pneg %p65
        $region46: #{tpu_custom_call.1} parent=39 // pred_check_branch
          %245 = sbr.rel (%p243) target = $region48
        $region47: #{tpu_custom_call.1} parent=39 // pred_region
          %246 = dma.done [#allocation6], 2048
        $region48: #{tpu_custom_call.1} parent=39 // pred_fallthru
          _
        // Predicated region
        $region49: #{tpu_custom_call.1} parent=39 // pred_check
          %p247 = pneg %p107
        $region50: #{tpu_custom_call.1} parent=39 // pred_check_branch
          %249 = sbr.rel (%p247) target = $region52
        $region51: #{tpu_custom_call.1} parent=39 // pred_region
          %250 = dma.done [#allocation6], 1024
        $region52: #{tpu_custom_call.1} parent=39 // pred_fallthru
          _
        %s251 = sand.u32 %s31, 1
        %s252 = scalar_lea.sflag [#allocation3], %s251
        %s253 = sand.u32 %s31, 1
        %s254 = smul.addr %s253, 256
        %s255 = scalar_lea.vmem [#allocation2], %s254
        %p256 = pneg %p44
        %p257 = pneg %p41
        %p258 = pneg %p65
        %p259 = pneg %p62
        %p260 = pneg %p86
        %p261 = pneg %p83
        %p262 = pneg %p107
        %p263 = pneg %p104
        %p264 = pneg %p128
        %p265 = pneg %p125
        %p266 = pneg %p154
        %p267 = pneg %p151
        %s268 = sand.u32 %s141, 1
        %s269 = scalar_lea.sflag [#allocation4], %s268
        %s270 = sand.u32 %s141, 1
        %s271 = smul.addr %s270, 128
        %s272 = scalar_lea.vmem [#allocation8], %s271
        %s273 = smul.u32 16, %s23
        %s274 = smul.u32 16, %s23
        %v276 = vld [vmem:[%s238] sm:$0xff]
        %v277 = vld [vmem:[%s238 + $0x8] sm:$0xff]
        %v278 = vld [vmem:[%s238 + $0x10] sm:$0xff]
        %v279 = vld [vmem:[%s238 + $0x18] sm:$0xff]
        %v280 = vld [vmem:[%s238 + $0x20] sm:$0xff]
        %v281 = vld [vmem:[%s238 + $0x28] sm:$0xff]
        %v282 = vld [vmem:[%s238 + $0x30] sm:$0xff]
        %v283 = vld [vmem:[%s238 + $0x38] sm:$0xff]
        %v284 = vld [vmem:[%s238 + $0x40] sm:$0xff]
        %v285 = vld [vmem:[%s238 + $0x48] sm:$0xff]
        %v286 = vld [vmem:[%s238 + $0x50] sm:$0xff]
        %v287 = vld [vmem:[%s238 + $0x58] sm:$0xff]
        %v288 = vld [vmem:[%s238 + $0x60] sm:$0xff]
        %v289 = vld [vmem:[%s238 + $0x68] sm:$0xff]
        %v290 = vld [vmem:[%s238 + $0x70] sm:$0xff]
        %v291 = vld [vmem:[%s238 + $0x78] sm:$0xff]
        %v292 = vld [vmem:[%s238 + $0x80] sm:$0xff]
        %v293 = vld [vmem:[%s238 + $0x88] sm:$0xff]
        %v294 = vld [vmem:[%s238 + $0x90] sm:$0xff]
        %v295 = vld [vmem:[%s238 + $0x98] sm:$0xff]
        %v296 = vld [vmem:[%s238 + $0xa0] sm:$0xff]
        %v297 = vld [vmem:[%s238 + $0xa8] sm:$0xff]
        %v298 = vld [vmem:[%s238 + $0xb0] sm:$0xff]
        %v299 = vld [vmem:[%s238 + $0xb8] sm:$0xff]
        %v300 = vld [vmem:[%s238 + $0xc0] sm:$0xff]
        %v301 = vld [vmem:[%s238 + $0xc8] sm:$0xff]
        %v302 = vld [vmem:[%s238 + $0xd0] sm:$0xff]
        %v303 = vld [vmem:[%s238 + $0xd8] sm:$0xff]
        %v304 = vld [vmem:[%s238 + $0xe0] sm:$0xff]
        %v305 = vld [vmem:[%s238 + $0xe8] sm:$0xff]
        %v306 = vld [vmem:[%s238 + $0xf0] sm:$0xff]
        %v307 = vld [vmem:[%s238 + $0xf8] sm:$0xff]
        %v308 = vmul.f32 %v276, %v276
        %v309 = vmul.f32 %v277, %v277
        %v310 = vmul.f32 %v278, %v278
        %v311 = vmul.f32 %v279, %v279
        %v312 = vmul.f32 %v280, %v280
        %v313 = vmul.f32 %v281, %v281
        %v314 = vmul.f32 %v282, %v282
        %v315 = vmul.f32 %v283, %v283
        %v316 = vmul.f32 %v284, %v284
        %v317 = vmul.f32 %v285, %v285
        %v318 = vmul.f32 %v286, %v286
        %v319 = vmul.f32 %v287, %v287
        %v320 = vmul.f32 %v288, %v288
        %v321 = vmul.f32 %v289, %v289
        %v322 = vmul.f32 %v290, %v290
        %v323 = vmul.f32 %v291, %v291
        %v324 = vmul.f32 %v292, %v292
        %v325 = vmul.f32 %v293, %v293
        %v326 = vmul.f32 %v294, %v294
        %v327 = vmul.f32 %v295, %v295
        %v328 = vmul.f32 %v296, %v296
        %v329 = vmul.f32 %v297, %v297
        %v330 = vmul.f32 %v298, %v298
        %v331 = vmul.f32 %v299, %v299
        %v332 = vmul.f32 %v300, %v300
        %v333 = vmul.f32 %v301, %v301
        %v334 = vmul.f32 %v302, %v302
        %v335 = vmul.f32 %v303, %v303
        %v336 = vmul.f32 %v304, %v304
        %v337 = vmul.f32 %v305, %v305
        %v338 = vmul.f32 %v306, %v306
        %v339 = vmul.f32 %v307, %v307
        %v340 = vadd.f32 %v308, %v309
        %341 = vadd.xlane.f32.xlu0 %v340
        %v342 = vpop.xlane.xlu0 %341
        %v343 = vadd.f32 %v310, %v311
        %344 = vadd.xlane.f32.xlu0 %v343
        %v345 = vpop.xlane.xlu0 %344
        %v346 = vadd.f32 %v312, %v313
        %347 = vadd.xlane.f32.xlu0 %v346
        %v348 = vpop.xlane.xlu0 %347
        %v349 = vadd.f32 %v314, %v315
        %350 = vadd.xlane.f32.xlu0 %v349
        %v351 = vpop.xlane.xlu0 %350
        %v352 = vadd.f32 %v316, %v317
        %353 = vadd.xlane.f32.xlu0 %v352
        %v354 = vpop.xlane.xlu0 %353
        %v355 = vadd.f32 %v318, %v319
        %356 = vadd.xlane.f32.xlu0 %v355
        %v357 = vpop.xlane.xlu0 %356
        %v358 = vadd.f32 %v320, %v321
        %359 = vadd.xlane.f32.xlu0 %v358
        %v360 = vpop.xlane.xlu0 %359
        %v361 = vadd.f32 %v322, %v323
        %362 = vadd.xlane.f32.xlu0 %v361
        %v363 = vpop.xlane.xlu0 %362
        %v364 = vadd.f32 %v324, %v325
        %365 = vadd.xlane.f32.xlu0 %v364
        %v366 = vpop.xlane.xlu0 %365
        %v367 = vadd.f32 %v326, %v327
        %368 = vadd.xlane.f32.xlu0 %v367
        %v369 = vpop.xlane.xlu0 %368
        %v370 = vadd.f32 %v328, %v329
        %371 = vadd.xlane.f32.xlu0 %v370
        %v372 = vpop.xlane.xlu0 %371
        %v373 = vadd.f32 %v330, %v331
        %374 = vadd.xlane.f32.xlu0 %v373
        %v375 = vpop.xlane.xlu0 %374
        %v376 = vadd.f32 %v332, %v333
        %377 = vadd.xlane.f32.xlu0 %v376
        %v378 = vpop.xlane.xlu0 %377
        %v379 = vadd.f32 %v334, %v335
        %380 = vadd.xlane.f32.xlu0 %v379
        %v381 = vpop.xlane.xlu0 %380
        %v382 = vadd.f32 %v336, %v337
        %383 = vadd.xlane.f32.xlu0 %v382
        %v384 = vpop.xlane.xlu0 %383
        %v385 = vadd.f32 %v338, %v339
        %386 = vadd.xlane.f32.xlu0 %v385
        %v387 = vpop.xlane.xlu0 %386
        %v388 = vmax.f32 %v342, 1e-24
        %v389 = vmax.f32 %v345, 1e-24
        %v390 = vmax.f32 %v348, 1e-24
        %v391 = vmax.f32 %v351, 1e-24
        %v392 = vmax.f32 %v354, 1e-24
        %v393 = vmax.f32 %v357, 1e-24
        %v394 = vmax.f32 %v360, 1e-24
        %v395 = vmax.f32 %v363, 1e-24
        %v396 = vmax.f32 %v366, 1e-24
        %v397 = vmax.f32 %v369, 1e-24
        %v398 = vmax.f32 %v372, 1e-24
        %v399 = vmax.f32 %v375, 1e-24
        %v400 = vmax.f32 %v378, 1e-24
        %v401 = vmax.f32 %v381, 1e-24
        %v402 = vmax.f32 %v384, 1e-24
        %v403 = vmax.f32 %v387, 1e-24
        %v404 = vrsqrt.pop %v388
        %v405 = vrsqrt.pop %v389
        %v406 = vrsqrt.pop %v390
        %v407 = vrsqrt.pop %v391
        %v408 = vrsqrt.pop %v392
        %v409 = vrsqrt.pop %v393
        %v410 = vrsqrt.pop %v394
        %v411 = vrsqrt.pop %v395
        %v412 = vrsqrt.pop %v396
        %v413 = vrsqrt.pop %v397
        %v414 = vrsqrt.pop %v398
        %v415 = vrsqrt.pop %v399
        %v416 = vrsqrt.pop %v400
        %v417 = vrsqrt.pop %v401
        %v418 = vrsqrt.pop %v402
        %v419 = vrsqrt.pop %v403
        %v420 = vmul.f32 %v276, %v404
        %v421 = vmul.f32 %v277, %v404
        %v422 = vmul.f32 %v278, %v405
        %v423 = vmul.f32 %v279, %v405
        %v424 = vmul.f32 %v280, %v406
        %v425 = vmul.f32 %v281, %v406
        %v426 = vmul.f32 %v282, %v407
        %v427 = vmul.f32 %v283, %v407
        %v428 = vmul.f32 %v284, %v408
        %v429 = vmul.f32 %v285, %v408
        %v430 = vmul.f32 %v286, %v409
        %v431 = vmul.f32 %v287, %v409
        %v432 = vmul.f32 %v288, %v410
        %v433 = vmul.f32 %v289, %v410
        %v434 = vmul.f32 %v290, %v411
        %v435 = vmul.f32 %v291, %v411
        %v436 = vmul.f32 %v292, %v412
        %v437 = vmul.f32 %v293, %v412
        %v438 = vmul.f32 %v294, %v413
        %v439 = vmul.f32 %v295, %v413
        %v440 = vmul.f32 %v296, %v414
        %v441 = vmul.f32 %v297, %v414
        %v442 = vmul.f32 %v298, %v415
        %v443 = vmul.f32 %v299, %v415
        %v444 = vmul.f32 %v300, %v416
        %v445 = vmul.f32 %v301, %v416
        %v446 = vmul.f32 %v302, %v417
        %v447 = vmul.f32 %v303, %v417
        %v448 = vmul.f32 %v304, %v418
        %v449 = vmul.f32 %v305, %v418
        %v450 = vmul.f32 %v306, %v419
        %v451 = vmul.f32 %v307, %v419
        %v452 = vpack.c.bf16 %v422, %v420
        %v453 = vpack.c.bf16 %v423, %v421
        %v454 = vpack.c.bf16 %v426, %v424
        %v455 = vpack.c.bf16 %v427, %v425
        %v456 = vpack.c.bf16 %v430, %v428
        %v457 = vpack.c.bf16 %v431, %v429
        %v458 = vpack.c.bf16 %v434, %v432
        %v459 = vpack.c.bf16 %v435, %v433
        %v460 = vpack.c.bf16 %v438, %v436
        %v461 = vpack.c.bf16 %v439, %v437
        %v462 = vpack.c.bf16 %v442, %v440
        %v463 = vpack.c.bf16 %v443, %v441
        %v464 = vpack.c.bf16 %v446, %v444
        %v465 = vpack.c.bf16 %v447, %v445
        %v466 = vpack.c.bf16 %v450, %v448
        %v467 = vpack.c.bf16 %v451, %v449
        %v468 = vld [vmem:[#allocation5] sm:$0xf]
        %v469 = vld [vmem:[#allocation5 + $0x4] sm:$0xf]
        %v470 = vld [vmem:[#allocation5 + $0x8] sm:$0xf]
        %v471 = vld [vmem:[#allocation5 + $0xc] sm:$0xf]
        %v472 = vld [vmem:[#allocation5 + $0x10] sm:$0xf]
        %v473 = vld [vmem:[#allocation5 + $0x14] sm:$0xf]
        %v474 = vld [vmem:[#allocation5 + $0x18] sm:$0xf]
        %v475 = vld [vmem:[#allocation5 + $0x1c] sm:$0xf]
        %v476 = vld [vmem:[#allocation5 + $0x20] sm:$0xf]
        %v477 = vld [vmem:[#allocation5 + $0x24] sm:$0xf]
        %v478 = vld [vmem:[#allocation5 + $0x28] sm:$0xf]
        %v479 = vld [vmem:[#allocation5 + $0x2c] sm:$0xf]
        %v480 = vld [vmem:[#allocation5 + $0x30] sm:$0xf]
        %v481 = vld [vmem:[#allocation5 + $0x34] sm:$0xf]
        %v482 = vld [vmem:[#allocation5 + $0x38] sm:$0xf]
        %v483 = vld [vmem:[#allocation5 + $0x3c] sm:$0xf]
        %v484 = vld [vmem:[#allocation5 + $0x40] sm:$0xf]
        %v485 = vld [vmem:[#allocation5 + $0x44] sm:$0xf]
        %v486 = vld [vmem:[#allocation5 + $0x48] sm:$0xf]
        %v487 = vld [vmem:[#allocation5 + $0x4c] sm:$0xf]
        %v488 = vld [vmem:[#allocation5 + $0x50] sm:$0xf]
        %v489 = vld [vmem:[#allocation5 + $0x54] sm:$0xf]
        %v490 = vld [vmem:[#allocation5 + $0x58] sm:$0xf]
        %v491 = vld [vmem:[#allocation5 + $0x5c] sm:$0xf]
        %v492 = vld [vmem:[#allocation5 + $0x60] sm:$0xf]
        %v493 = vld [vmem:[#allocation5 + $0x64] sm:$0xf]
        %v494 = vld [vmem:[#allocation5 + $0x68] sm:$0xf]
        %v495 = vld [vmem:[#allocation5 + $0x6c] sm:$0xf]
        %v496 = vld [vmem:[#allocation5 + $0x70] sm:$0xf]
        %v497 = vld [vmem:[#allocation5 + $0x74] sm:$0xf]
        %v498 = vld [vmem:[#allocation5 + $0x78] sm:$0xf]
        %v499 = vld [vmem:[#allocation5 + $0x7c] sm:$0xf]
        %v500 = vld [vmem:[%s2] sm:$0x1]
        %v502 = vlaneseq
        %v503 = vshrl.u32 %v502, 7
        %v504 = vsub.s32 0, %v503
        %v505 = vrot.slane %v500, %v504
        %v539 = vunpack.c.l.b16 %v468
        %v540 = vunpack.c.l.b16 %v469
        %v541 = vunpack.c.l.b16 %v470
        %v542 = vunpack.c.l.b16 %v471
        %v543 = vunpack.c.l.b16 %v472
        %v544 = vunpack.c.l.b16 %v473
        %v545 = vunpack.c.l.b16 %v474
        %v546 = vunpack.c.l.b16 %v475
        %v547 = vunpack.c.l.b16 %v476
        %v548 = vunpack.c.l.b16 %v477
        %v549 = vunpack.c.l.b16 %v478
        %v550 = vunpack.c.l.b16 %v479
        %v551 = vunpack.c.l.b16 %v480
        %v552 = vunpack.c.l.b16 %v481
        %v553 = vunpack.c.l.b16 %v482
        %v554 = vunpack.c.l.b16 %v483
        %v555 = vunpack.c.l.b16 %v484
        %v556 = vunpack.c.l.b16 %v485
        %v557 = vunpack.c.l.b16 %v486
        %v558 = vunpack.c.l.b16 %v487
        %v559 = vunpack.c.l.b16 %v488
        %v560 = vunpack.c.l.b16 %v489
        %v561 = vunpack.c.l.b16 %v490
        %v562 = vunpack.c.l.b16 %v491
        %v563 = vunpack.c.l.b16 %v492
        %v564 = vunpack.c.l.b16 %v493
        %v565 = vunpack.c.l.b16 %v494
        %v566 = vunpack.c.l.b16 %v495
        %v567 = vunpack.c.l.b16 %v496
        %v568 = vunpack.c.l.b16 %v497
        %v569 = vunpack.c.l.b16 %v498
        %v570 = vunpack.c.l.b16 %v499
        %v571 = vpack.c.b16 %v540, %v539
        %v572 = vpack.c.b16 %v542, %v541
        %v573 = vpack.c.b16 %v544, %v543
        %v574 = vpack.c.b16 %v546, %v545
        %v575 = vpack.c.b16 %v548, %v547
        %v576 = vpack.c.b16 %v550, %v549
        %v577 = vpack.c.b16 %v552, %v551
        %v578 = vpack.c.b16 %v554, %v553
        %v579 = vpack.c.b16 %v556, %v555
        %v580 = vpack.c.b16 %v558, %v557
        %v581 = vpack.c.b16 %v560, %v559
        %v582 = vpack.c.b16 %v562, %v561
        %v583 = vpack.c.b16 %v564, %v563
        %v584 = vpack.c.b16 %v566, %v565
        %v585 = vpack.c.b16 %v568, %v567
        %v586 = vpack.c.b16 %v570, %v569
        %603 = vmatprep.subr.bf16.mxu0 0
        %604 = vmatpush1.bf16.msra.mxu0 %v571
        %605 = vmatprep.subr.bf16.mxu0 0
        %606 = vmatpush1.bf16.msra.mxu0 %v572
        %607 = vmatprep.subr.bf16.mxu0 0
        %608 = vmatpush1.bf16.msra.mxu0 %v573
        %609 = vmatprep.subr.bf16.mxu0 0
        %610 = vmatpush1.bf16.msra.mxu0 %v574
        %611 = vmatprep.subr.bf16.mxu0 0
        %612 = vmatpush1.bf16.msra.mxu0 %v575
        %613 = vmatprep.subr.bf16.mxu0 0
        %614 = vmatpush1.bf16.msra.mxu0 %v576
        %615 = vmatprep.subr.bf16.mxu0 0
        %616 = vmatpush1.bf16.msra.mxu0 %v577
        %617 = vmatprep.subr.bf16.mxu0 0
        %618 = vmatpush1.bf16.msra.mxu0 %v578
        %619 = vmatprep.subr.bf16.mxu0 0
        %620 = vmatpush1.bf16.msra.mxu0 %v579
        %621 = vmatprep.subr.bf16.mxu0 0
        %622 = vmatpush1.bf16.msra.mxu0 %v580
        %623 = vmatprep.subr.bf16.mxu0 0
        %624 = vmatpush1.bf16.msra.mxu0 %v581
        %625 = vmatprep.subr.bf16.mxu0 0
        %626 = vmatpush1.bf16.msra.mxu0 %v582
        %627 = vmatprep.subr.bf16.mxu0 0
        %628 = vmatpush1.bf16.msra.mxu0 %v583
        %629 = vmatprep.subr.bf16.mxu0 0
        %630 = vmatpush1.bf16.msra.mxu0 %v584
        %631 = vmatprep.subr.bf16.mxu0 0
        %632 = vmatpush1.bf16.msra.mxu0 %v585
        %633 = vmatprep.subr.bf16.mxu0 0
        %634 = vmatpush1.bf16.msra.mxu0 %v586
        %635 = vmatprep.mubr.bf16.mxu0 %v453
        %636 = vmatmul.mubr.bf16.gmra.mrb[0].mxu0 %v452
        %v637 = vpop.f32.mrb[0].mxu0
        %v638 = vadd.f32 %v505, %v637
        %v639 = vpop.f32.mrb[0].mxu0
        %v640 = vpop.f32.mrb[0].mxu0
        %v641 = vadd.f32 %v505, %v640
        %v642 = vpop.f32.mrb[0].mxu0
        %643 = vmatprep.mubr.bf16.mxu0 %v455
        %644 = vmatmul.mubr.bf16.gmra.mrb[0].mxu0 %v454
        %v645 = vpop.f32.mrb[0].mxu0
        %v646 = vadd.f32 %v505, %v645
        %v647 = vpop.f32.mrb[0].mxu0
        %v648 = vpop.f32.mrb[0].mxu0
        %v649 = vadd.f32 %v505, %v648
        %v650 = vpop.f32.mrb[0].mxu0
        %651 = vmatprep.mubr.bf16.mxu0 %v457
        %652 = vmatmul.mubr.bf16.gmra.mrb[0].mxu0 %v456
        %v653 = vpop.f32.mrb[0].mxu0
        %v654 = vadd.f32 %v505, %v653
        %v655 = vpop.f32.mrb[0].mxu0
        %v656 = vpop.f32.mrb[0].mxu0
        %v657 = vadd.f32 %v505, %v656
        %v658 = vpop.f32.mrb[0].mxu0
        %659 = vmatprep.mubr.bf16.mxu0 %v459
        %660 = vmatmul.mubr.bf16.gmra.mrb[0].mxu0 %v458
        %v661 = vpop.f32.mrb[0].mxu0
        %v662 = vadd.f32 %v505, %v661
        %v663 = vpop.f32.mrb[0].mxu0
        %v664 = vpop.f32.mrb[0].mxu0
        %v665 = vadd.f32 %v505, %v664
        %v666 = vpop.f32.mrb[0].mxu0
        %667 = vmatprep.mubr.bf16.mxu0 %v461
        %668 = vmatmul.mubr.bf16.gmra.mrb[0].mxu0 %v460
        %v669 = vpop.f32.mrb[0].mxu0
        %v670 = vadd.f32 %v505, %v669
        %v671 = vpop.f32.mrb[0].mxu0
        %v672 = vpop.f32.mrb[0].mxu0
        %v673 = vadd.f32 %v505, %v672
        %v674 = vpop.f32.mrb[0].mxu0
        %675 = vmatprep.mubr.bf16.mxu0 %v463
        %676 = vmatmul.mubr.bf16.gmra.mrb[0].mxu0 %v462
        %v677 = vpop.f32.mrb[0].mxu0
        %v678 = vadd.f32 %v505, %v677
        %v679 = vpop.f32.mrb[0].mxu0
        %v680 = vpop.f32.mrb[0].mxu0
        %v681 = vadd.f32 %v505, %v680
        %v682 = vpop.f32.mrb[0].mxu0
        %683 = vmatprep.mubr.bf16.mxu0 %v465
        %684 = vmatmul.mubr.bf16.gmra.mrb[0].mxu0 %v464
        %v685 = vpop.f32.mrb[0].mxu0
        %v686 = vadd.f32 %v505, %v685
        %v687 = vpop.f32.mrb[0].mxu0
        %v688 = vpop.f32.mrb[0].mxu0
        %v689 = vadd.f32 %v505, %v688
        %v690 = vpop.f32.mrb[0].mxu0
        %691 = vmatprep.mubr.bf16.mxu0 %v467
        %692 = vmatmul.mubr.bf16.gmra.mrb[0].mxu0 %v466
        %v693 = vpop.f32.mrb[0].mxu0
        %v694 = vadd.f32 %v505, %v693
        %v695 = vpop.f32.mrb[0].mxu0
        %v696 = vpop.f32.mrb[0].mxu0
        %v697 = vadd.f32 %v505, %v696
        %v698 = vpop.f32.mrb[0].mxu0
        %699 = vdwg.mxu0
        %v700 = vtanh.pop %v638
        %v701 = vtanh.pop %v641
        %v702 = vtanh.pop %v646
        %v703 = vtanh.pop %v649
        %v704 = vtanh.pop %v654
        %v705 = vtanh.pop %v657
        %v706 = vtanh.pop %v662
        %v707 = vtanh.pop %v665
        %v708 = vtanh.pop %v670
        %v709 = vtanh.pop %v673
        %v710 = vtanh.pop %v678
        %v711 = vtanh.pop %v681
        %v712 = vtanh.pop %v686
        %v713 = vtanh.pop %v689
        %v714 = vtanh.pop %v694
        %v715 = vtanh.pop %v697
        %v716 = vpack.c.bf16 %v701, %v700
        %v717 = vpack.c.bf16 %v703, %v702
        %v718 = vpack.c.bf16 %v705, %v704
        %v719 = vpack.c.bf16 %v707, %v706
        %v720 = vpack.c.bf16 %v709, %v708
        %v721 = vpack.c.bf16 %v711, %v710
        %v722 = vpack.c.bf16 %v713, %v712
        %v723 = vpack.c.bf16 %v715, %v714
        %v724 = vld [vmem:[#allocation7] sm:$0xf]
        %v725 = vld [vmem:[#allocation7 + $0x4] sm:$0xf]
        %v726 = vld [vmem:[#allocation7 + $0x8] sm:$0xf]
        %v727 = vld [vmem:[#allocation7 + $0xc] sm:$0xf]
        %v728 = vld [vmem:[#allocation7 + $0x10] sm:$0xf]
        %v729 = vld [vmem:[#allocation7 + $0x14] sm:$0xf]
        %v730 = vld [vmem:[#allocation7 + $0x18] sm:$0xf]
        %v731 = vld [vmem:[#allocation7 + $0x1c] sm:$0xf]
        %v732 = vld [vmem:[#allocation7 + $0x20] sm:$0xf]
        %v733 = vld [vmem:[#allocation7 + $0x24] sm:$0xf]
        %v734 = vld [vmem:[#allocation7 + $0x28] sm:$0xf]
        %v735 = vld [vmem:[#allocation7 + $0x2c] sm:$0xf]
        %v736 = vld [vmem:[#allocation7 + $0x30] sm:$0xf]
        %v737 = vld [vmem:[#allocation7 + $0x34] sm:$0xf]
        %v738 = vld [vmem:[#allocation7 + $0x38] sm:$0xf]
        %v739 = vld [vmem:[#allocation7 + $0x3c] sm:$0xf]
        %v740 = vld [vmem:[%s4] sm:$0x1]
        %v742 = vlaneseq
        %v743 = vshrl.u32 %v742, 7
        %v744 = vsub.s32 0, %v743
        %v745 = vrot.slane %v740, %v744
        %v763 = vunpack.c.l.b16 %v724
        %v764 = vunpack.c.l.b16 %v725
        %v765 = vunpack.c.l.b16 %v726
        %v766 = vunpack.c.l.b16 %v727
        %v767 = vunpack.c.l.b16 %v728
        %v768 = vunpack.c.l.b16 %v729
        %v769 = vunpack.c.l.b16 %v730
        %v770 = vunpack.c.l.b16 %v731
        %v771 = vunpack.c.l.b16 %v732
        %v772 = vunpack.c.l.b16 %v733
        %v773 = vunpack.c.l.b16 %v734
        %v774 = vunpack.c.l.b16 %v735
        %v775 = vunpack.c.l.b16 %v736
        %v776 = vunpack.c.l.b16 %v737
        %v777 = vunpack.c.l.b16 %v738
        %v778 = vunpack.c.l.b16 %v739
        %v779 = vpack.c.b16 %v764, %v763
        %v780 = vpack.c.b16 %v766, %v765
        %v781 = vpack.c.b16 %v768, %v767
        %v782 = vpack.c.b16 %v770, %v769
        %v783 = vpack.c.b16 %v772, %v771
        %v784 = vpack.c.b16 %v774, %v773
        %v785 = vpack.c.b16 %v776, %v775
        %v786 = vpack.c.b16 %v778, %v777
        %795 = vmatprep.subr.bf16.mxu0 0
        %796 = vmatpush1.bf16.msra.mxu0 %v779
        %797 = vmatprep.subr.bf16.mxu0 0
        %798 = vmatpush1.bf16.msra.mxu0 %v780
        %799 = vmatprep.subr.bf16.mxu0 0
        %800 = vmatpush1.bf16.msra.mxu0 %v781
        %801 = vmatprep.subr.bf16.mxu0 0
        %802 = vmatpush1.bf16.msra.mxu0 %v782
        %803 = vmatprep.subr.bf16.mxu0 0
        %804 = vmatpush1.bf16.msra.mxu0 %v783
        %805 = vmatprep.subr.bf16.mxu0 0
        %806 = vmatpush1.bf16.msra.mxu0 %v784
        %807 = vmatprep.subr.bf16.mxu0 0
        %808 = vmatpush1.bf16.msra.mxu0 %v785
        %809 = vmatprep.subr.bf16.mxu0 0
        %810 = vmatpush1.bf16.msra.mxu0 %v786
        %811 = vmatprep.subr.bf16.mxu0 0
        %812 = vmatpush1.bf16.msra.mxu0 0
        %813 = vmatprep.subr.bf16.mxu0 0
        %814 = vmatpush1.bf16.msra.mxu0 0
        %815 = vmatprep.subr.bf16.mxu0 0
        %816 = vmatpush1.bf16.msra.mxu0 0
        %817 = vmatprep.subr.bf16.mxu0 0
        %818 = vmatpush1.bf16.msra.mxu0 0
        %819 = vmatprep.subr.bf16.mxu0 0
        %820 = vmatpush1.bf16.msra.mxu0 0
        %821 = vmatprep.subr.bf16.mxu0 0
        %822 = vmatpush1.bf16.msra.mxu0 0
        %823 = vmatprep.subr.bf16.mxu0 0
        %824 = vmatpush1.bf16.msra.mxu0 0
        %825 = vmatprep.subr.bf16.mxu0 0
        %826 = vmatpush1.bf16.msra.mxu0 0
        %827 = vmatprep.mubr.bf16.mxu0 0
        %828 = vmatmul.mubr.bf16.gmra.mrb[0].mxu0 %v716
        %v829 = vpop.f32.mrb[0].mxu0
        %v830 = vadd.f32 %v745, %v829
        %v831 = vpop.f32.mrb[0].mxu0
        %v832 = vpop.f32.mrb[0].mxu0
        %v833 = vadd.f32 %v745, %v832
        %v834 = vpop.f32.mrb[0].mxu0
        %835 = vmatprep.mubr.bf16.mxu0 0
        %836 = vmatmul.mubr.bf16.gmra.mrb[0].mxu0 %v717
        %v837 = vpop.f32.mrb[0].mxu0
        %v838 = vadd.f32 %v745, %v837
        %v839 = vpop.f32.mrb[0].mxu0
        %v840 = vpop.f32.mrb[0].mxu0
        %v841 = vadd.f32 %v745, %v840
        %v842 = vpop.f32.mrb[0].mxu0
        %843 = vmatprep.mubr.bf16.mxu0 0
        %844 = vmatmul.mubr.bf16.gmra.mrb[0].mxu0 %v718
        %v845 = vpop.f32.mrb[0].mxu0
        %v846 = vadd.f32 %v745, %v845
        %v847 = vpop.f32.mrb[0].mxu0
        %v848 = vpop.f32.mrb[0].mxu0
        %v849 = vadd.f32 %v745, %v848
        %v850 = vpop.f32.mrb[0].mxu0
        %851 = vmatprep.mubr.bf16.mxu0 0
        %852 = vmatmul.mubr.bf16.gmra.mrb[0].mxu0 %v719
        %v853 = vpop.f32.mrb[0].mxu0
        %v854 = vadd.f32 %v745, %v853
        %v855 = vpop.f32.mrb[0].mxu0
        %v856 = vpop.f32.mrb[0].mxu0
        %v857 = vadd.f32 %v745, %v856
        %v858 = vpop.f32.mrb[0].mxu0
        %859 = vmatprep.mubr.bf16.mxu0 0
        %860 = vmatmul.mubr.bf16.gmra.mrb[0].mxu0 %v720
        %v861 = vpop.f32.mrb[0].mxu0
        %v862 = vadd.f32 %v745, %v861
        %v863 = vpop.f32.mrb[0].mxu0
        %v864 = vpop.f32.mrb[0].mxu0
        %v865 = vadd.f32 %v745, %v864
        %v866 = vpop.f32.mrb[0].mxu0
        %867 = vmatprep.mubr.bf16.mxu0 0
        %868 = vmatmul.mubr.bf16.gmra.mrb[0].mxu0 %v721
        %v869 = vpop.f32.mrb[0].mxu0
        %v870 = vadd.f32 %v745, %v869
        %v871 = vpop.f32.mrb[0].mxu0
        %v872 = vpop.f32.mrb[0].mxu0
        %v873 = vadd.f32 %v745, %v872
        %v874 = vpop.f32.mrb[0].mxu0
        %875 = vmatprep.mubr.bf16.mxu0 0
        %876 = vmatmul.mubr.bf16.gmra.mrb[0].mxu0 %v722
        %v877 = vpop.f32.mrb[0].mxu0
        %v878 = vadd.f32 %v745, %v877
        %v879 = vpop.f32.mrb[0].mxu0
        %v880 = vpop.f32.mrb[0].mxu0
        %v881 = vadd.f32 %v745, %v880
        %v882 = vpop.f32.mrb[0].mxu0
        %883 = vmatprep.mubr.bf16.mxu0 0
        %884 = vmatmul.mubr.bf16.gmra.mrb[0].mxu0 %v723
        %v885 = vpop.f32.mrb[0].mxu0
        %v886 = vadd.f32 %v745, %v885
        %v887 = vpop.f32.mrb[0].mxu0
        %v888 = vpop.f32.mrb[0].mxu0
        %v889 = vadd.f32 %v745, %v888
        %v890 = vpop.f32.mrb[0].mxu0
        %891 = vdwg.mxu0
        %892 = vst [vmem:[%s272] sm:$0xff] %v830
        %893 = vst [vmem:[%s272 + $0x8] sm:$0xff] %v833
        %894 = vst [vmem:[%s272 + $0x10] sm:$0xff] %v838
        %895 = vst [vmem:[%s272 + $0x18] sm:$0xff] %v841
        %896 = vst [vmem:[%s272 + $0x20] sm:$0xff] %v846
        %897 = vst [vmem:[%s272 + $0x28] sm:$0xff] %v849
        %898 = vst [vmem:[%s272 + $0x30] sm:$0xff] %v854
        %899 = vst [vmem:[%s272 + $0x38] sm:$0xff] %v857
        %900 = vst [vmem:[%s272 + $0x40] sm:$0xff] %v862
        %901 = vst [vmem:[%s272 + $0x48] sm:$0xff] %v865
        %902 = vst [vmem:[%s272 + $0x50] sm:$0xff] %v870
        %903 = vst [vmem:[%s272 + $0x58] sm:$0xff] %v873
        %904 = vst [vmem:[%s272 + $0x60] sm:$0xff] %v878
        %905 = vst [vmem:[%s272 + $0x68] sm:$0xff] %v881
        %906 = vst [vmem:[%s272 + $0x70] sm:$0xff] %v886
        %907 = vst [vmem:[%s272 + $0x78] sm:$0xff] %v889
        %s908 = sand.u32 %s141, 1
        %s909 = scalar_lea.sflag [#allocation4], %s908
        %s910 = sand.u32 %s141, 1
        %s911 = smul.addr %s910, 128
        %s912 = scalar_lea.vmem [#allocation8], %s911
        // Predicated region
        $region53: #{tpu_custom_call.1} parent=39 // pred_check
          %p913 = pneg %p151
        $region54: #{tpu_custom_call.1} parent=39 // pred_check_branch
          %915 = sbr.rel (%p913) target = $region56
        $region55: #{tpu_custom_call.1} parent=39 // pred_region
          %s916 = smul.u32 16, %s23
          %s918 = ssub.s32 2048, 2048
          %919 = vsyncadd %s909, %s918
          %s920 = smul.addr %s916, 128
          %s921 = scalar_lea.hbm %s5, %s920
          %s922 = sshll.u32 %s912, 4
          %s923 = int_to_ptr.vmem [resolvable:$true] %s922
          %928 = dma.vmem_to_hbm [thread:$0]  %s923, 2048, %s921, %s909, 128, 128, 8
        $region56: #{tpu_custom_call.1} parent=39 // pred_fallthru
          _
      $region40: #{tpu_custom_call.1} parent=5 // pred_fallthru
        _
      %p929 = scmp.le.s32.totalorder 2, %s18
      // Predicated region
      $region57: #{tpu_custom_call.1} parent=5 // pred_check
        %p930 = pneg %p929
      $region58: #{tpu_custom_call.1} parent=5 // pred_check_branch
        %932 = sbr.rel (%p930) target = $region60
      $region59: #{tpu_custom_call.1} parent=5 // pred_region
        %s933 = ssub.s32 %s18, 2
        // Predicated region
        $region61: #{tpu_custom_call.1} parent=59 // pred_check
          %p934 = pneg %p157
        $region62: #{tpu_custom_call.1} parent=59 // pred_check_branch
          %936 = sbr.rel (%p934) target = $region64
        $region63: #{tpu_custom_call.1} parent=59 // pred_region
          %s937 = sand.u32 %s142, 1
          %s938 = scalar_lea.sflag [#allocation4], %s937
          %s939 = sand.u32 %s142, 1
          %s940 = smul.addr %s939, 128
          %s941 = scalar_lea.vmem [#allocation8], %s940
          %942 = dma.done %s938, 2048
        $region64: #{tpu_custom_call.1} parent=59 // pred_fallthru
          _
      $region60: #{tpu_custom_call.1} parent=5 // pred_fallthru
        _
    $region6: #{tpu_custom_call.1} parent=1 // loop_footer
      %s22 = sadd.s32 1, %s18
    $region7: #{tpu_custom_call.1} parent=1 // loop_footer_branch
      %17 = sbr.rel target = $region3
    $region8: #{tpu_custom_call.1} parent=1 // loop_exit
      _
    %943 = vsyncpa [#allocation3], 1
    %s944 = scalar_lea.sflag [#allocation3], 1
    %945 = vsyncpa %s944, 1
    %946 = vsyncpa [#allocation6], 1
    %947 = vsyncpa [#allocation4], 1
    %s948 = scalar_lea.sflag [#allocation4], 1
    %949 = vsyncpa %s948, 1

</llo_original>
